<compile_context>
chip_gen: v6e
topology: v6e:2x2x1
jax: 0.10.0
libtpu: 0.0.40
codegen_flags: <defaults>
</compile_context>

<pallas_src>
import functools
import itertools

import jax
import jax.numpy as jnp
import numpy as np
from jax.experimental import pallas as pl
from jax.experimental.pallas import tpu as pltpu


# ---------------------------------------------------------------------------
# Deterministic JPEG constants (exactly what DiffJPEG444YUV.py builds).
# Note: in this 444-YUV variant both luma and chroma quantizers use y_table.
# ---------------------------------------------------------------------------
_Y_TABLE = np.array(
    [[16, 11, 10, 16, 24, 40, 51, 61],
     [12, 12, 14, 19, 26, 58, 60, 55],
     [14, 13, 16, 24, 40, 57, 69, 56],
     [14, 17, 22, 29, 51, 87, 80, 62],
     [18, 22, 37, 56, 68, 109, 103, 77],
     [24, 35, 55, 64, 81, 104, 113, 92],
     [49, 64, 78, 87, 103, 121, 120, 101],
     [72, 92, 95, 98, 112, 100, 103, 99]], dtype=np.float32).T

# Orthonormal 8-point DCT matrix: C8[u, x] = 0.5 * alpha[u] * cos((2x+1)u pi/16)
# so that the module's 2D DCT is  C8 @ (block - 128) @ C8^T  and the IDCT is
# C8^T @ coef @ C8 + 128.
_ALPHA = np.array([1.0 / np.sqrt(2.0)] + [1.0] * 7, dtype=np.float64)
_C8 = np.zeros((8, 8), dtype=np.float64)
for _u in range(8):
    for _x in range(8):
        _C8[_u, _x] = 0.5 * _ALPHA[_u] * np.cos((2 * _x + 1) * _u * np.pi / 16.0)
_C8 = _C8.astype(np.float32)


def _blockdiag(block8, n):
    out = np.zeros((8 * n, 8 * n), dtype=np.float32)
    for i in range(n):
        out[8 * i:8 * (i + 1), 8 * i:8 * (i + 1)] = block8
    return out


def quality_to_factor(quality):
    if quality < 50:
        quality = 5000.0 / quality
    else:
        quality = 200.0 - quality * 2
    return quality / 100.0


def _largest_divisor_leq(n, cap):
    cap = max(1, min(cap, n))
    for d in range(cap, 0, -1):
        if n % d == 0:
            return d
    return 1


def _pick_chunk(dim, lo, hi):
    """Multiple-of-8 divisor of `dim` used as the per-matmul block edge."""
    if dim <= hi:
        return dim
    divs = [d for d in range(8, dim + 1, 8) if dim % d == 0]
    good = [d for d in divs if lo <= d <= hi]
    if good:
        return min(good)
    ge = [d for d in divs if d > hi]
    return min(ge) if ge else dim


# ---------------------------------------------------------------------------
# Fused kernel: per (channel, batch, row-block, col-block) tile of the image,
# loop over (rch, cch) chunks and do  DCT -> quantize+round -> dequantize ->
# IDCT -> clamp, writing quantized coefficients (natural layout) and the
# recovered image (natural layout).
# ---------------------------------------------------------------------------
def _diffjpeg_kernel(x_ref, l_ref, lt_ref, r_ref, rt_ref, q_ref, iq_ref,
                     coef_ref, rec_ref, *, rch, cch, differentiable, precision):
    h_blk, w_blk = x_ref.shape
    L = l_ref[...]       # (rch, rch) block-diag of C8        (column DCT)
    Lt = lt_ref[...]     # (rch, rch) block-diag of C8^T      (column IDCT)
    R = r_ref[...]       # (cch, cch) block-diag of C8^T      (row DCT)
    Rt = rt_ref[...]     # (cch, cch) block-diag of C8        (row IDCT)
    qt = q_ref[...]      # (rch, cch)  y_table * factor, tiled
    iqt = iq_ref[...]    # (rch, cch)  1 / (y_table * factor), tiled

    for ri in range(h_blk // rch):
        for ci in range(w_blk // cch):
            rs = pl.ds(ri * rch, rch)
            cs = pl.ds(ci * cch, cch)
            x = x_ref[rs, cs].astype(jnp.float32) * jnp.float32(255.0) \
                - jnp.float32(128.0)
            # Separable 2D DCT:  C8 @ x @ C8^T  (block-diagonal per 8x8 block).
            d = jnp.dot(L, x, preferred_element_type=jnp.float32,
                        precision=precision)
            d = jnp.dot(d, R, preferred_element_type=jnp.float32,
                        precision=precision)
            s = d * iqt
            rr = jnp.round(s)                      # half-to-even == torch.round
            if differentiable:                     # diff_round
                qz = rr + (s - rr) ** 3
            else:
                qz = rr
            coef_ref[rs, cs] = qz

            deq = qz * qt
            # Separable 2D IDCT:  C8^T @ deq @ C8.
            rec = jnp.dot(Lt, deq, preferred_element_type=jnp.float32,
                          precision=precision)
            rec = jnp.dot(rec, Rt, preferred_element_type=jnp.float32,
                          precision=precision)
            rec = jnp.clip(rec + jnp.float32(128.0), 0.0, 255.0) \
                * jnp.float32(1.0 / 255.0)
            rec_ref[rs, cs] = rec.astype(rec_ref.dtype)


# ---------------------------------------------------------------------------
# Wrapper: tiling heuristics + pallas_call (no input transpose, no padding).
# ---------------------------------------------------------------------------
@functools.partial(jax.jit,
                   static_argnames=("differentiable", "high_precision",
                                    "target_elems"))
def diff_jpeg_forward(x, factor, differentiable=True, high_precision=True,
                      target_elems=262144):
    """DiffJPEG forward.  x: (B, 3, H, W) in [0,1]; factor: scalar (traced).

    Returns (y, cb, cr, recovered) matching the PyTorch module:
      y/cb/cr: (B, H*W/64, 8, 8) quantized DCT coefficients (f32),
      recovered: (B, 3, H, W) in [0,1] (same dtype as x).
    """
    B, C, H, W = x.shape
    assert C == 3 and H % 8 == 0 and W % 8 == 0
    nb = (H // 8) * (W // 8)

    if x.dtype not in (jnp.dtype(jnp.float32), jnp.dtype(jnp.bfloat16)):
        x = x.astype(jnp.float32)

    # Per-matmul block edges (multiples of 8; kept small so MXU FLOPs stay
    # well under the HBM roofline even with HIGHEST precision).
    rch = _pick_chunk(H, 64, 128)
    cch = _pick_chunk(W, 128, 256)

    # DMA block sizes: multiples of the matmul chunks that divide H / W, big
    # enough (~target_elems per step) to amortize the per-step overhead while
    # staying far inside every generation's scoped VMEM.
    if cch % 128 == 0:
        cc_mult = _largest_divisor_leq(W // cch, max(1, 1024 // cch))
    else:
        # lane rule: block last dim must be a multiple of 128 or the full W.
        cc_mult = W // cch
    w_blk = cch * cc_mult
    rc_mult = _largest_divisor_leq(H // rch,
                                   max(1, target_elems // (w_blk * rch)))

    # Keep >= ~8 grid steps so the pipeline stays busy and the 'parallel' axes
    # shard evenly across v7x's two TensorCores.
    def _steps(rm, cm):
        return 3 * B * (H // (rch * rm)) * (W // (cch * cm))

    while _steps(rc_mult, cc_mult) < 8:
        if rc_mult > 1:
            rc_mult = _largest_divisor_leq(H // rch, rc_mult - 1)
        elif cc_mult > 1 and cch % 128 == 0:
            cc_mult = _largest_divisor_leq(W // cch, cc_mult - 1)
        else:
            break
    h_blk = rch * rc_mult
    w_blk = cch * cc_mult

    # Block-diagonal DCT matrices and tiled quantization chunks.
    L = jnp.asarray(_blockdiag(_C8, rch // 8))
    Lt = jnp.asarray(_blockdiag(_C8.T, rch // 8))
    R = jnp.asarray(_blockdiag(_C8.T, cch // 8))
    Rt = jnp.asarray(_blockdiag(_C8, cch // 8))

    f = jnp.asarray(factor, jnp.float32)
    ytab = jnp.asarray(np.tile(_Y_TABLE, (rch // 8, cch // 8)), jnp.float32)
    qt = ytab * f                    # traced -> quality change never recompiles
    iqt = 1.0 / qt

    precision = jax.lax.Precision.HIGHEST if high_precision else None
    kernel = functools.partial(_diffjpeg_kernel, rch=rch, cch=cch,
                               differentiable=differentiable,
                               precision=precision)

    grid = (3, B, H // h_blk, W // w_blk)

    x_spec = pl.BlockSpec((None, None, h_blk, w_blk),
                          lambda c, b, i, j: (b, c, i, j))
    coef_spec = pl.BlockSpec((None, None, h_blk, w_blk),
                             lambda c, b, i, j: (c, b, i, j))
    rec_spec = pl.BlockSpec((None, None, h_blk, w_blk),
                            lambda c, b, i, j: (b, c, i, j))

    def _const_spec(shape):
        return pl.BlockSpec(shape, lambda c, b, i, j: (0, 0))

    n_elems = 3 * B * H * W
    flops = int(4 * (rch + cch) * n_elems + 12 * n_elems)
    bytes_accessed = int(n_elems * (x.dtype.itemsize + 4 + x.dtype.itemsize))

    coef_nat, recovered = pl.pallas_call(
        kernel,
        out_shape=(jax.ShapeDtypeStruct((3, B, H, W), jnp.float32),
                   jax.ShapeDtypeStruct((B, 3, H, W), x.dtype)),
        grid=grid,
        in_specs=[
            x_spec,                      # image block (natural layout)
            _const_spec((rch, rch)),     # L   (column DCT)
            _const_spec((rch, rch)),     # L^T (column IDCT)
            _const_spec((cch, cch)),     # R   (row DCT)
            _const_spec((cch, cch)),     # R^T (row IDCT)
            _const_spec((rch, cch)),     # y_table * factor (tiled)
            _const_spec((rch, cch)),     # 1 / (y_table * factor) (tiled)
        ],
        out_specs=(coef_spec, rec_spec),
        compiler_params=pltpu.CompilerParams(
            dimension_semantics=("parallel",) * 4),
        cost_estimate=pl.CostEstimate(
            flops=flops, transcendentals=0, bytes_accessed=bytes_accessed),
    )(x, L, Lt, R, Rt, qt, iqt)

    # Coefficients: natural (3,B,H,W) -> module's blocked (B, nb, 8, 8) layout.
    # This is the one remaining XLA transpose (order-changing permutation).
    coef = coef_nat.reshape(3, B, H // 8, 8, W // 8, 8)
    coef = coef.transpose(0, 1, 2, 4, 3, 5).reshape(3, B, nb, 8, 8)
    return coef[0], coef[1], coef[2], recovered


# ---------------------------------------------------------------------------
# Pure-JAX faithful port of the PyTorch forward (for verification only).
# ---------------------------------------------------------------------------
def _build_dct_consts():
    t = np.zeros((8, 8, 8, 8), dtype=np.float32)
    for xx, yy, uu, vv in itertools.product(range(8), repeat=4):
        t[xx, yy, uu, vv] = (np.cos((2 * xx + 1) * uu * np.pi / 16) *
                             np.cos((2 * yy + 1) * vv * np.pi / 16))
    alpha = np.array([1.0 / np.sqrt(2)] + [1.0] * 7)
    scale = (np.outer(alpha, alpha) * 0.25).astype(np.float32)

    t2 = np.zeros((8, 8, 8, 8), dtype=np.float32)
    for xx, yy, uu, vv in itertools.product(range(8), repeat=4):
        t2[xx, yy, uu, vv] = (np.cos((2 * uu + 1) * xx * np.pi / 16) *
                              np.cos((2 * vv + 1) * yy * np.pi / 16))
    alpha_o = np.outer(alpha, alpha).astype(np.float32)
    return t, scale, t2, alpha_o


_DCT_T, _DCT_SCALE, _IDCT_T, _IDCT_ALPHA = _build_dct_consts()


def diff_jpeg_ref(x, quality=80, differentiable=True):
    factor = quality_to_factor(quality)
    ytab = jnp.asarray(_Y_TABLE)
    t = jnp.asarray(_DCT_T)
    scale = jnp.asarray(_DCT_SCALE)
    t2 = jnp.asarray(_IDCT_T)
    alpha = jnp.asarray(_IDCT_ALPHA)
    hi = jax.lax.Precision.HIGHEST

    B, _, H, W = x.shape
    img = (x.astype(jnp.float32) * 255.0).transpose(0, 2, 3, 1)     # EncPermute
    comps, recs = [], []
    for c in range(3):                                              # ChannelSplit
        ch = img[..., c]
        blocks = (ch.reshape(B, H // 8, 8, W // 8, 8)
                    .transpose(0, 1, 3, 2, 4).reshape(B, -1, 8, 8))  # BlockSplitting
        d = scale * jnp.tensordot(blocks - 128.0, t, axes=2, precision=hi)  # DCT8x8
        s = d / (ytab * factor)                                     # YQuantize
        r = jnp.round(s)
        q = r + (s - r) ** 3 if differentiable else r
        comps.append(q)
        deq = q * (ytab * factor)                                   # YDequantize
        rec = 0.25 * jnp.tensordot(deq * alpha, t2, axes=2, precision=hi) + 128.0
        rec = (rec.reshape(B, H // 8, W // 8, 8, 8)
                  .transpose(0, 1, 3, 2, 4).reshape(B, H, W))        # BlockMerging
        recs.append(rec)
    image = jnp.stack(recs, axis=-1)                                # ChannelMerge
    image = image.transpose(0, 3, 1, 2)                             # DecPermute
    image = jnp.minimum(255.0, jnp.maximum(0.0, image)) / 255.0
    return comps[0], comps[1], comps[2], image


def _assert_close_mod_round_flips(name, got, want, atol, flip_bound,
                                  max_flip_frac=0.02):
    """allclose that tolerates a handful of one-quantization-step flips.

    The kernel uses a separable DCT, a precomputed reciprocal quant table and
    (by default) HIGHEST-precision MXU matmuls; results are algebraically
    identical to the reference but values that land essentially on a .5
    rounding boundary can still flip by one quantization step.
    """
    got = np.asarray(got)
    want = np.asarray(want)
    diff = np.abs(got - want)
    n_bad = int((diff > atol).sum())
    max_bad = max(8, int(max_flip_frac * diff.size))
    if float(diff.max()) > flip_bound or n_bad > max_bad:
        raise AssertionError(
            f"{name}: max|diff|={float(diff.max()):.3e}, "
            f"{n_bad}/{diff.size} elements exceed atol={atol}")


if __name__ == "__main__":
    key = jax.random.PRNGKey(0)
    B, H, W = 2, 16, 16
    quality = 80
    differentiable = True

    x = jax.random.uniform(key, (B, 3, H, W), dtype=jnp.float32)
    factor = jnp.float32(quality_to_factor(quality))

    y, cb, cr, recovered = diff_jpeg_forward(
        x, factor, differentiable=differentiable)
    recovered = jax.block_until_ready(recovered)

    y_r, cb_r, cr_r, rec_r = diff_jpeg_ref(
        x, quality=quality, differentiable=differentiable)

    _assert_close_mod_round_flips("y", y, y_r, atol=2e-2, flip_bound=1.25)
    _assert_close_mod_round_flips("cb", cb, cb_r, atol=2e-2, flip_bound=1.25)
    _assert_close_mod_round_flips("cr", cr, cr_r, atol=2e-2, flip_bound=1.25)
    _assert_close_mod_round_flips("recovered", recovered, rec_r,
                                  atol=5e-3, flip_bound=0.15)

    print("KERNEL_OK")
</pallas_src>

<mosaic_0001>
module attributes {stable_mosaic.version = 11 : i64} {
  func.func @_diffjpeg_kernel(%arg0: i32, %arg1: i32, %arg2: i32, %arg3: i32, %arg4: memref<1x1x16x16xf32, #tpu.memory_space<vmem>>, %arg5: memref<16x16xf32, #tpu.memory_space<vmem>>, %arg6: memref<16x16xf32, #tpu.memory_space<vmem>>, %arg7: memref<16x16xf32, #tpu.memory_space<vmem>>, %arg8: memref<16x16xf32, #tpu.memory_space<vmem>>, %arg9: memref<16x16xf32, #tpu.memory_space<vmem>>, %arg10: memref<16x16xf32, #tpu.memory_space<vmem>>, %arg11: memref<1x1x16x16xf32, #tpu.memory_space<vmem>>, %arg12: memref<1x1x16x16xf32, #tpu.memory_space<vmem>>) attributes {dimension_semantics = [#tpu.dimension_semantics<parallel>, #tpu.dimension_semantics<parallel>, #tpu.dimension_semantics<parallel>, #tpu.dimension_semantics<parallel>], iteration_bounds = array<i64: 3, 2, 1, 1>, scalar_prefetch = 0 : i64, scratch_operands = 0 : i64, tpu.core_type = #tpu.core_type<tc>, window_params = [{transform_indices = @transform_0, window_bounds = array<i64: 1, 1, 16, 16>}, {pipeline_mode = #tpu.pipeline_mode<synchronous>, transform_indices = @transform_1, window_bounds = array<i64: 16, 16>}, {pipeline_mode = #tpu.pipeline_mode<synchronous>, transform_indices = @transform_2, window_bounds = array<i64: 16, 16>}, {pipeline_mode = #tpu.pipeline_mode<synchronous>, transform_indices = @transform_3, window_bounds = array<i64: 16, 16>}, {pipeline_mode = #tpu.pipeline_mode<synchronous>, transform_indices = @transform_4, window_bounds = array<i64: 16, 16>}, {pipeline_mode = #tpu.pipeline_mode<synchronous>, transform_indices = @transform_5, window_bounds = array<i64: 16, 16>}, {pipeline_mode = #tpu.pipeline_mode<synchronous>, transform_indices = @transform_6, window_bounds = array<i64: 16, 16>}, {transform_indices = @transform_7, window_bounds = array<i64: 1, 1, 16, 16>}, {transform_indices = @transform_8, window_bounds = array<i64: 1, 1, 16, 16>}]} {
    %c0 = arith.constant 0 : index
    %c0_0 = arith.constant 0 : index
    %0 = vector.load %arg5[%c0, %c0_0] : memref<16x16xf32, #tpu.memory_space<vmem>>, vector<16x16xf32>
    %c0_1 = arith.constant 0 : index
    %c0_2 = arith.constant 0 : index
    %1 = vector.load %arg6[%c0_1, %c0_2] : memref<16x16xf32, #tpu.memory_space<vmem>>, vector<16x16xf32>
    %c0_3 = arith.constant 0 : index
    %c0_4 = arith.constant 0 : index
    %2 = vector.load %arg7[%c0_3, %c0_4] : memref<16x16xf32, #tpu.memory_space<vmem>>, vector<16x16xf32>
    %c0_5 = arith.constant 0 : index
    %c0_6 = arith.constant 0 : index
    %3 = vector.load %arg8[%c0_5, %c0_6] : memref<16x16xf32, #tpu.memory_space<vmem>>, vector<16x16xf32>
    %c0_7 = arith.constant 0 : index
    %c0_8 = arith.constant 0 : index
    %4 = vector.load %arg9[%c0_7, %c0_8] : memref<16x16xf32, #tpu.memory_space<vmem>>, vector<16x16xf32>
    %c0_9 = arith.constant 0 : index
    %c0_10 = arith.constant 0 : index
    %5 = vector.load %arg10[%c0_9, %c0_10] : memref<16x16xf32, #tpu.memory_space<vmem>>, vector<16x16xf32>
    %c0_11 = arith.constant 0 : index
    %c0_12 = arith.constant 0 : index
    %c0_13 = arith.constant 0 : index
    %c0_14 = arith.constant 0 : index
    %6 = vector.load %arg4[%c0_11, %c0_12, %c0_13, %c0_14] : memref<1x1x16x16xf32, #tpu.memory_space<vmem>>, vector<1x1x16x16xf32>
    %7 = vector.shape_cast %6 : vector<1x1x16x16xf32> to vector<16x16xf32>
    %cst = arith.constant 2.550000e+02 : f32
    %8 = vector.broadcast %cst : f32 to vector<16x16xf32>
    %9 = arith.mulf %7, %8 : vector<16x16xf32>
    %cst_15 = arith.constant 1.280000e+02 : f32
    %10 = vector.broadcast %cst_15 : f32 to vector<16x16xf32>
    %11 = arith.subf %9, %10 : vector<16x16xf32>
    %cst_16 = arith.constant dense<0.000000e+00> : vector<16x16xf32>
    %12 = tpu.matmul %0, %11, %cst_16 {dimension_numbers = #tpu.dot_dimension_numbers<[1], [0], [0], [1], [0, 0, 1, 1], [], []>, precision = #tpu.contract_precision<fp32>} : vector<16x16xf32>, vector<16x16xf32>, vector<16x16xf32> -> vector<16x16xf32>
    %cst_17 = arith.constant dense<0.000000e+00> : vector<16x16xf32>
    %13 = tpu.matmul %12, %2, %cst_17 {dimension_numbers = #tpu.dot_dimension_numbers<[1], [0], [0], [1], [0, 0, 1, 1], [], []>, precision = #tpu.contract_precision<fp32>} : vector<16x16xf32>, vector<16x16xf32>, vector<16x16xf32> -> vector<16x16xf32>
    %14 = arith.mulf %13, %5 : vector<16x16xf32>
    %15 = math.roundeven %14 : vector<16x16xf32>
    %16 = arith.subf %14, %15 : vector<16x16xf32>
    %17 = arith.mulf %16, %16 : vector<16x16xf32>
    %18 = arith.mulf %16, %17 : vector<16x16xf32>
    %19 = arith.addf %15, %18 : vector<16x16xf32>
    %c0_18 = arith.constant 0 : index
    %c0_19 = arith.constant 0 : index
    %c0_20 = arith.constant 0 : index
    %c0_21 = arith.constant 0 : index
    %20 = vector.load %arg11[%c0_18, %c0_19, %c0_20, %c0_21] : memref<1x1x16x16xf32, #tpu.memory_space<vmem>>, vector<1x1x16x16xf32>
    %21 = vector.shape_cast %20 : vector<1x1x16x16xf32> to vector<16x16xf32>
    %22 = vector.shape_cast %19 : vector<16x16xf32> to vector<1x1x16x16xf32>
    tpu.vector_store %arg11[%c0_18, %c0_19, %c0_20, %c0_21], %22 {strides = array<i32>} : memref<1x1x16x16xf32, #tpu.memory_space<vmem>>, vector<1x1x16x16xf32>,
    %23 = arith.mulf %19, %4 : vector<16x16xf32>
    %cst_22 = arith.constant dense<0.000000e+00> : vector<16x16xf32>
    %24 = tpu.matmul %1, %23, %cst_22 {dimension_numbers = #tpu.dot_dimension_numbers<[1], [0], [0], [1], [0, 0, 1, 1], [], []>, precision = #tpu.contract_precision<fp32>} : vector<16x16xf32>, vector<16x16xf32>, vector<16x16xf32> -> vector<16x16xf32>
    %cst_23 = arith.constant dense<0.000000e+00> : vector<16x16xf32>
    %25 = tpu.matmul %24, %3, %cst_23 {dimension_numbers = #tpu.dot_dimension_numbers<[1], [0], [0], [1], [0, 0, 1, 1], [], []>, precision = #tpu.contract_precision<fp32>} : vector<16x16xf32>, vector<16x16xf32>, vector<16x16xf32> -> vector<16x16xf32>
    %cst_24 = arith.constant 1.280000e+02 : f32
    %26 = vector.broadcast %cst_24 : f32 to vector<16x16xf32>
    %27 = arith.addf %25, %26 : vector<16x16xf32>
    %cst_25 = arith.constant 0.000000e+00 : f32
    %cst_26 = arith.constant 2.550000e+02 : f32
    %28 = vector.broadcast %cst_25 : f32 to vector<16x16xf32>
    %29 = arith.maximumf %28, %27 : vector<16x16xf32>
    %30 = vector.broadcast %cst_26 : f32 to vector<16x16xf32>
    %31 = arith.minimumf %30, %29 : vector<16x16xf32>
    %cst_27 = arith.constant 0.00392156886 : f32
    %32 = vector.broadcast %cst_27 : f32 to vector<16x16xf32>
    %33 = arith.mulf %31, %32 : vector<16x16xf32>
    %c0_28 = arith.constant 0 : index
    %c0_29 = arith.constant 0 : index
    %c0_30 = arith.constant 0 : index
    %c0_31 = arith.constant 0 : index
    %34 = vector.load %arg12[%c0_28, %c0_29, %c0_30, %c0_31] : memref<1x1x16x16xf32, #tpu.memory_space<vmem>>, vector<1x1x16x16xf32>
    %35 = vector.shape_cast %34 : vector<1x1x16x16xf32> to vector<16x16xf32>
    %36 = vector.shape_cast %33 : vector<16x16xf32> to vector<1x1x16x16xf32>
    tpu.vector_store %arg12[%c0_28, %c0_29, %c0_30, %c0_31], %36 {strides = array<i32>} : memref<1x1x16x16xf32, #tpu.memory_space<vmem>>, vector<1x1x16x16xf32>,
    return
  }
  func.func @transform_0(%arg0: i32, %arg1: i32, %arg2: i32, %arg3: i32) -> (i32, i32, i32, i32) {
    %c0_i32 = arith.constant 0 : i32
    return %arg1, %arg0, %arg2, %arg3 : i32, i32, i32, i32
  }
  func.func @transform_1(%arg0: i32, %arg1: i32, %arg2: i32, %arg3: i32) -> (i32, i32) {
    %c0_i32 = arith.constant 0 : i32
    %c0_i32_0 = arith.constant 0 : i32
    %c0_i32_1 = arith.constant 0 : i32
    return %c0_i32, %c0_i32_0 : i32, i32
  }
  func.func @transform_2(%arg0: i32, %arg1: i32, %arg2: i32, %arg3: i32) -> (i32, i32) {
    %c0_i32 = arith.constant 0 : i32
    %c0_i32_0 = arith.constant 0 : i32
    %c0_i32_1 = arith.constant 0 : i32
    return %c0_i32, %c0_i32_0 : i32, i32
  }
  func.func @transform_3(%arg0: i32, %arg1: i32, %arg2: i32, %arg3: i32) -> (i32, i32) {
    %c0_i32 = arith.constant 0 : i32
    %c0_i32_0 = arith.constant 0 : i32
    %c0_i32_1 = arith.constant 0 : i32
    return %c0_i32, %c0_i32_0 : i32, i32
  }
  func.func @transform_4(%arg0: i32, %arg1: i32, %arg2: i32, %arg3: i32) -> (i32, i32) {
    %c0_i32 = arith.constant 0 : i32
    %c0_i32_0 = arith.constant 0 : i32
    %c0_i32_1 = arith.constant 0 : i32
    return %c0_i32, %c0_i32_0 : i32, i32
  }
  func.func @transform_5(%arg0: i32, %arg1: i32, %arg2: i32, %arg3: i32) -> (i32, i32) {
    %c0_i32 = arith.constant 0 : i32
    %c0_i32_0 = arith.constant 0 : i32
    %c0_i32_1 = arith.constant 0 : i32
    return %c0_i32, %c0_i32_0 : i32, i32
  }
  func.func @transform_6(%arg0: i32, %arg1: i32, %arg2: i32, %arg3: i32) -> (i32, i32) {
    %c0_i32 = arith.constant 0 : i32
    %c0_i32_0 = arith.constant 0 : i32
    %c0_i32_1 = arith.constant 0 : i32
    return %c0_i32, %c0_i32_0 : i32, i32
  }
  func.func @transform_7(%arg0: i32, %arg1: i32, %arg2: i32, %arg3: i32) -> (i32, i32, i32, i32) {
    %c0_i32 = arith.constant 0 : i32
    return %arg0, %arg1, %arg2, %arg3 : i32, i32, i32, i32
  }
  func.func @transform_8(%arg0: i32, %arg1: i32, %arg2: i32, %arg3: i32) -> (i32, i32, i32, i32) {
    %c0_i32 = arith.constant 0 : i32
    return %arg1, %arg0, %arg2, %arg3 : i32, i32, i32, i32
  }
}

</mosaic_0001>

<llo_original>
// kernel: diff_jpeg_forward.1
$region0: #{diff_jpeg_forward.1}
  #allocation0 [shape = 'u32[]', space=smem, size = 0x4, offset = 0x4, fixed_abs, tag = 'smem constant byte address 0x4 - core index']
  #allocation1 [shape = 'u32[144,128]{1,0:T(1,128)}', space=vmem, size = 0x12000, scoped, tag = 'internal scratch']
  %s0 = inlined_call_operand.hbm [shape: f32[2,3,16,16], index: 0, kind: input, shape index: {}]
  %s1 = inlined_call_operand.vmem [shape: f32[16,16], index: 1, kind: input, shape index: {}, may-alias: {1,4}]
  %s2 = inlined_call_operand.vmem [shape: f32[16,16], index: 2, kind: input, shape index: {}, may-alias: {2,3}]
  %s3 = inlined_call_operand.vmem [shape: f32[16,16], index: 3, kind: input, shape index: {}, may-alias: {2,3}]
  %s4 = inlined_call_operand.vmem [shape: f32[16,16], index: 4, kind: input, shape index: {}, may-alias: {1,4}]
  %s5 = inlined_call_operand.vmem [shape: f32[16,16], index: 5, kind: input, shape index: {}]
  %s6 = inlined_call_operand.vmem [shape: f32[16,16], index: 6, kind: input, shape index: {}]
  %s7 = inlined_call_operand.vmem [shape: f32[3,2,16,16], index: 7, kind: output, shape index: {0}]
  %s8 = inlined_call_operand.hbm [shape: f32[2,3,16,16], index: 8, kind: output, shape index: {1}]
  %9 = xla_tuple %s7, %s8
  %s10 = sld [smem:[#allocation0]]
  $region73: #{diff_jpeg_forward.1} parent=0
    _
  %s12 = ssub.s32 1, %s10
  %s13 = scalar_select 0, %s12, %s10
  $region1: #{diff_jpeg_forward.1} parent=0
    #allocation2 [shape = 'u8[16384]{0}', space=vmem, size = 0x4000, scoped, tag = 'input window, operand 0']
    #allocation3 [shape = 's32[2]{0}', space=sflag, size = 0x8, scoped, tag = 'scoped memory for diff_jpeg_forward.1']
    #allocation4 [shape = 's32[2]{0}', space=sflag, size = 0x8, scoped, tag = 'scoped memory for diff_jpeg_forward.1']
    #allocation5 [shape = 'u8[16384]{0}', space=vmem, size = 0x4000, scoped, tag = 'output window, operand 1']
    %14 = vsyncpa [#allocation3], 0
    %s15 = scalar_lea.sflag [#allocation3], 1
    %16 = vsyncpa %s15, 0
    %17 = vsyncpa [#allocation4], 0
    %s18 = scalar_lea.sflag [#allocation4], 1
    %19 = vsyncpa %s18, 0
    loop: start=0, step=1, limit=8
    $region2: #{diff_jpeg_forward.1} parent=1 // loop_pre_header
      _
    $region3: #{diff_jpeg_forward.1} parent=1 // loop_header
      %s21 = sphi 0, %s25
      %p22 = scmp.ge.s32.totalorder %s21, 8
      %s28 = sphi 0, %s54
      %s29 = sphi 0, %s50
      %s30 = sphi 0, %s46
      %s31 = sphi 0, %s42
      %s32 = sphi 0, %s28
      %s33 = sphi 0, %s29
      %s34 = sphi 0, %s30
      %s35 = sphi 0, %s31
      %s36 = sphi 0, %s32
      %s37 = sphi 0, %s33
      %s38 = sphi 0, %s34
      %s39 = sphi 0, %s35
      %s63 = sphi 0, %s65
      %s66 = sphi 0, %s63
      %s67 = sphi 0, %s66
      %s83 = sphi 0, %s67
      %s87 = sphi 0, %s87
      %s89 = sphi 0, %s87
      %s90 = sphi 0, %s89
      %s104 = sphi 0, %s90
      %s108 = sphi 0, %s108
      %s110 = sphi 0, %s108
      %s111 = sphi 0, %s110
      %s125 = sphi 0, %s111
      %s129 = sphi 0, %s129
      %s131 = sphi 0, %s129
      %s132 = sphi 0, %s131
      %s146 = sphi 0, %s132
      %s150 = sphi 0, %s150
      %s152 = sphi 0, %s150
      %s153 = sphi 0, %s152
      %s167 = sphi 0, %s153
      %s171 = sphi 0, %s171
      %s173 = sphi 0, %s171
      %s174 = sphi 0, %s173
      %s188 = sphi 0, %s174
      %s192 = sphi 0, %s192
      %s194 = sphi 0, %s192
      %s195 = sphi 0, %s194
      %s209 = sphi 0, %s195
      %s221 = sphi 0, %s223
      %s224 = sphi 0, %s221
      %s225 = sphi 0, %s224
      %s241 = sphi 0, %s225
      %s253 = sphi 0, %s255
      %s256 = sphi 0, %s253
      %s257 = sphi 0, %s256
      %s273 = sphi 0, %s257
    $region4: #{diff_jpeg_forward.1} parent=1 // loop_header_branch
      %24 = sbr.rel (%p22) target = $region8
    $region5: #{diff_jpeg_forward.1} parent=1 // loop_body
      %s26 = ssub.s32 %s21, 1
      %s27 = ssub.s32 %s21, 2
      %s40 = sadd.s32 1, %s31
      %p41 = scmp.ge.s32.totalorder %s40, 1
      %s42 = scalar_select %p41, 0, %s40
      %s43 = sadd.s32 1, %s30
      %s44 = scalar_select %p41, %s43, %s30
      %p45 = scmp.ge.s32.totalorder %s44, 1
      %s46 = scalar_select %p45, 0, %s44
      %s47 = sadd.s32 1, %s29
      %s48 = scalar_select %p45, %s47, %s29
      %p49 = scmp.ge.s32.totalorder %s48, 2
      %s50 = scalar_select %p49, 0, %s48
      %s51 = sadd.s32 1, %s28
      %s52 = scalar_select %p49, %s51, %s28
      %p53 = scmp.ge.s32.totalorder %s52, 3
      %s54 = scalar_select %p53, 0, %s52
      %s55 = ssub.s32 %s29, %s50
      %s56 = ssub.s32 %s28, %s54
      %s57 = sor.u32 %s55, %s56
      %s58 = ssub.s32 %s30, %s46
      %s59 = sor.u32 %s57, %s58
      %s60 = ssub.s32 %s31, %s42
      %s61 = sor.u32 %s59, %s60
      %p62 = scmp.eq.s32.totalorder %s61, 0
      %s64 = sadd.s32 %s63, 1
      %s65 = scalar_select %p62, %s63, %s64
      %p68 = pneg %p62
      %p69 = scmp.eq.s32.totalorder %s21, 5
      %p70 = por %p68, %p69
      %p71 = scmp.ne.s32.totalorder %s63, %s66
      %p72 = scmp.eq.s32.totalorder %s21, 0
      %p73 = por %p71, %p72
      %p74 = scmp.ne.s32.totalorder %s63, %s66
      %p75 = scmp.eq.s32.totalorder %s26, 5
      %p76 = por %p74, %p75
      %p77 = scmp.ne.s32.totalorder %s66, %s67
      %p78 = scmp.eq.s32.totalorder %s26, 0
      %p79 = por %p77, %p78
      %p80 = scmp.ne.s32.totalorder %s66, %s67
      %p81 = scmp.eq.s32.totalorder %s27, 5
      %p82 = por %p80, %p81
      %p84 = scmp.ne.s32.totalorder %s67, %s83
      %p85 = scmp.eq.s32.totalorder %s27, 0
      %p86 = por %p84, %p85
      %s88 = sadd.s32 %s87, 1
      %p91 = scmp.eq.s32.totalorder %s21, 5
      %p92 = scmp.ne.s32.totalorder %s87, %s89
      %p93 = scmp.eq.s32.totalorder %s21, 0
      %p94 = por %p92, %p93
      %p95 = scmp.ne.s32.totalorder %s87, %s89
      %p96 = scmp.eq.s32.totalorder %s26, 5
      %p97 = por %p95, %p96
      %p98 = scmp.ne.s32.totalorder %s89, %s90
      %p99 = scmp.eq.s32.totalorder %s26, 0
      %p100 = por %p98, %p99
      %p101 = scmp.ne.s32.totalorder %s89, %s90
      %p102 = scmp.eq.s32.totalorder %s27, 5
      %p103 = por %p101, %p102
      %p105 = scmp.ne.s32.totalorder %s90, %s104
      %p106 = scmp.eq.s32.totalorder %s27, 0
      %p107 = por %p105, %p106
      %s109 = sadd.s32 %s108, 1
      %p112 = scmp.eq.s32.totalorder %s21, 5
      %p113 = scmp.ne.s32.totalorder %s108, %s110
      %p114 = scmp.eq.s32.totalorder %s21, 0
      %p115 = por %p113, %p114
      %p116 = scmp.ne.s32.totalorder %s108, %s110
      %p117 = scmp.eq.s32.totalorder %s26, 5
      %p118 = por %p116, %p117
      %p119 = scmp.ne.s32.totalorder %s110, %s111
      %p120 = scmp.eq.s32.totalorder %s26, 0
      %p121 = por %p119, %p120
      %p122 = scmp.ne.s32.totalorder %s110, %s111
      %p123 = scmp.eq.s32.totalorder %s27, 5
      %p124 = por %p122, %p123
      %p126 = scmp.ne.s32.totalorder %s111, %s125
      %p127 = scmp.eq.s32.totalorder %s27, 0
      %p128 = por %p126, %p127
      %s130 = sadd.s32 %s129, 1
      %p133 = scmp.eq.s32.totalorder %s21, 5
      %p134 = scmp.ne.s32.totalorder %s129, %s131
      %p135 = scmp.eq.s32.totalorder %s21, 0
      %p136 = por %p134, %p135
      %p137 = scmp.ne.s32.totalorder %s129, %s131
      %p138 = scmp.eq.s32.totalorder %s26, 5
      %p139 = por %p137, %p138
      %p140 = scmp.ne.s32.totalorder %s131, %s132
      %p141 = scmp.eq.s32.totalorder %s26, 0
      %p142 = por %p140, %p141
      %p143 = scmp.ne.s32.totalorder %s131, %s132
      %p144 = scmp.eq.s32.totalorder %s27, 5
      %p145 = por %p143, %p144
      %p147 = scmp.ne.s32.totalorder %s132, %s146
      %p148 = scmp.eq.s32.totalorder %s27, 0
      %p149 = por %p147, %p148
      %s151 = sadd.s32 %s150, 1
      %p154 = scmp.eq.s32.totalorder %s21, 5
      %p155 = scmp.ne.s32.totalorder %s150, %s152
      %p156 = scmp.eq.s32.totalorder %s21, 0
      %p157 = por %p155, %p156
      %p158 = scmp.ne.s32.totalorder %s150, %s152
      %p159 = scmp.eq.s32.totalorder %s26, 5
      %p160 = por %p158, %p159
      %p161 = scmp.ne.s32.totalorder %s152, %s153
      %p162 = scmp.eq.s32.totalorder %s26, 0
      %p163 = por %p161, %p162
      %p164 = scmp.ne.s32.totalorder %s152, %s153
      %p165 = scmp.eq.s32.totalorder %s27, 5
      %p166 = por %p164, %p165
      %p168 = scmp.ne.s32.totalorder %s153, %s167
      %p169 = scmp.eq.s32.totalorder %s27, 0
      %p170 = por %p168, %p169
      %s172 = sadd.s32 %s171, 1
      %p175 = scmp.eq.s32.totalorder %s21, 5
      %p176 = scmp.ne.s32.totalorder %s171, %s173
      %p177 = scmp.eq.s32.totalorder %s21, 0
      %p178 = por %p176, %p177
      %p179 = scmp.ne.s32.totalorder %s171, %s173
      %p180 = scmp.eq.s32.totalorder %s26, 5
      %p181 = por %p179, %p180
      %p182 = scmp.ne.s32.totalorder %s173, %s174
      %p183 = scmp.eq.s32.totalorder %s26, 0
      %p184 = por %p182, %p183
      %p185 = scmp.ne.s32.totalorder %s173, %s174
      %p186 = scmp.eq.s32.totalorder %s27, 5
      %p187 = por %p185, %p186
      %p189 = scmp.ne.s32.totalorder %s174, %s188
      %p190 = scmp.eq.s32.totalorder %s27, 0
      %p191 = por %p189, %p190
      %s193 = sadd.s32 %s192, 1
      %p196 = scmp.eq.s32.totalorder %s21, 5
      %p197 = scmp.ne.s32.totalorder %s192, %s194
      %p198 = scmp.eq.s32.totalorder %s21, 0
      %p199 = por %p197, %p198
      %p200 = scmp.ne.s32.totalorder %s192, %s194
      %p201 = scmp.eq.s32.totalorder %s26, 5
      %p202 = por %p200, %p201
      %p203 = scmp.ne.s32.totalorder %s194, %s195
      %p204 = scmp.eq.s32.totalorder %s26, 0
      %p205 = por %p203, %p204
      %p206 = scmp.ne.s32.totalorder %s194, %s195
      %p207 = scmp.eq.s32.totalorder %s27, 5
      %p208 = por %p206, %p207
      %p210 = scmp.ne.s32.totalorder %s195, %s209
      %p211 = scmp.eq.s32.totalorder %s27, 0
      %p212 = por %p210, %p211
      %s213 = ssub.s32 %s28, %s54
      %s214 = ssub.s32 %s29, %s50
      %s215 = sor.u32 %s213, %s214
      %s216 = ssub.s32 %s30, %s46
      %s217 = sor.u32 %s215, %s216
      %s218 = ssub.s32 %s31, %s42
      %s219 = sor.u32 %s217, %s218
      %p220 = scmp.eq.s32.totalorder %s219, 0
      %s222 = sadd.s32 %s221, 1
      %s223 = scalar_select %p220, %s221, %s222
      %p226 = pneg %p220
      %p227 = scmp.eq.s32.totalorder %s21, 5
      %p228 = por %p226, %p227
      %p229 = scmp.ne.s32.totalorder %s221, %s224
      %p230 = scmp.eq.s32.totalorder %s21, 0
      %p231 = por %p229, %p230
      %p232 = scmp.ne.s32.totalorder %s221, %s224
      %p233 = scmp.eq.s32.totalorder %s26, 5
      %p234 = por %p232, %p233
      %p235 = scmp.ne.s32.totalorder %s224, %s225
      %p236 = scmp.eq.s32.totalorder %s26, 0
      %p237 = por %p235, %p236
      %p238 = scmp.ne.s32.totalorder %s224, %s225
      %p239 = scmp.eq.s32.totalorder %s27, 5
      %p240 = por %p238, %p239
      %p242 = scmp.ne.s32.totalorder %s225, %s241
      %p243 = scmp.eq.s32.totalorder %s27, 0
      %p244 = por %p242, %p243
      %s245 = ssub.s32 %s29, %s50
      %s246 = ssub.s32 %s28, %s54
      %s247 = sor.u32 %s245, %s246
      %s248 = ssub.s32 %s30, %s46
      %s249 = sor.u32 %s247, %s248
      %s250 = ssub.s32 %s31, %s42
      %s251 = sor.u32 %s249, %s250
      %p252 = scmp.eq.s32.totalorder %s251, 0
      %s254 = sadd.s32 %s253, 1
      %s255 = scalar_select %p252, %s253, %s254
      %p258 = pneg %p252
      %p259 = scmp.eq.s32.totalorder %s21, 5
      %p260 = por %p258, %p259
      %p261 = scmp.ne.s32.totalorder %s253, %s256
      %p262 = scmp.eq.s32.totalorder %s21, 0
      %p263 = por %p261, %p262
      %p264 = scmp.ne.s32.totalorder %s253, %s256
      %p265 = scmp.eq.s32.totalorder %s26, 5
      %p266 = por %p264, %p265
      %p267 = scmp.ne.s32.totalorder %s256, %s257
      %p268 = scmp.eq.s32.totalorder %s26, 0
      %p269 = por %p267, %p268
      %p270 = scmp.ne.s32.totalorder %s256, %s257
      %p271 = scmp.eq.s32.totalorder %s27, 5
      %p272 = por %p270, %p271
      %p274 = scmp.ne.s32.totalorder %s257, %s273
      %p275 = scmp.eq.s32.totalorder %s27, 0
      %p276 = por %p274, %p275
      %p277 = scmp.le.s32.totalorder 1, %s21
      %p278 = scmp.lt.s32.totalorder %s21, 7
      %p279 = pnand %p277, %p278
      %p280 = pneg %p279
      // Predicated region
      $region9: #{diff_jpeg_forward.1} parent=5 // pred_check
        _
      $region10: #{diff_jpeg_forward.1} parent=5 // pred_check_branch
        %282 = sbr.rel (%p279) target = $region12
      $region11: #{diff_jpeg_forward.1} parent=5 // pred_region
        %s283 = ssub.s32 %s21, 1
        // Predicated region
        $region13: #{diff_jpeg_forward.1} parent=11 // pred_check
          %p284 = pneg %p100
        $region14: #{diff_jpeg_forward.1} parent=11 // pred_check_branch
          %286 = sbr.rel (%p284) target = $region16
        $region15: #{diff_jpeg_forward.1} parent=11 // pred_region
          _
        $region16: #{diff_jpeg_forward.1} parent=11 // pred_fallthru
          _
        // Predicated region
        $region17: #{diff_jpeg_forward.1} parent=11 // pred_check
          %p287 = pneg %p121
        $region18: #{diff_jpeg_forward.1} parent=11 // pred_check_branch
          %289 = sbr.rel (%p287) target = $region20
        $region19: #{diff_jpeg_forward.1} parent=11 // pred_region
          _
        $region20: #{diff_jpeg_forward.1} parent=11 // pred_fallthru
          _
        // Predicated region
        $region21: #{diff_jpeg_forward.1} parent=11 // pred_check
          %p290 = pneg %p142
        $region22: #{diff_jpeg_forward.1} parent=11 // pred_check_branch
          %292 = sbr.rel (%p290) target = $region24
        $region23: #{diff_jpeg_forward.1} parent=11 // pred_region
          _
        $region24: #{diff_jpeg_forward.1} parent=11 // pred_fallthru
          _
        // Predicated region
        $region25: #{diff_jpeg_forward.1} parent=11 // pred_check
          %p293 = pneg %p163
        $region26: #{diff_jpeg_forward.1} parent=11 // pred_check_branch
          %295 = sbr.rel (%p293) target = $region28
        $region27: #{diff_jpeg_forward.1} parent=11 // pred_region
          _
        $region28: #{diff_jpeg_forward.1} parent=11 // pred_fallthru
          _
        // Predicated region
        $region29: #{diff_jpeg_forward.1} parent=11 // pred_check
          %p296 = pneg %p184
        $region30: #{diff_jpeg_forward.1} parent=11 // pred_check_branch
          %298 = sbr.rel (%p296) target = $region32
        $region31: #{diff_jpeg_forward.1} parent=11 // pred_region
          _
        $region32: #{diff_jpeg_forward.1} parent=11 // pred_fallthru
          _
        // Predicated region
        $region33: #{diff_jpeg_forward.1} parent=11 // pred_check
          %p299 = pneg %p205
        $region34: #{diff_jpeg_forward.1} parent=11 // pred_check_branch
          %301 = sbr.rel (%p299) target = $region36
        $region35: #{diff_jpeg_forward.1} parent=11 // pred_region
          _
        $region36: #{diff_jpeg_forward.1} parent=11 // pred_fallthru
          _
      $region12: #{diff_jpeg_forward.1} parent=5 // pred_fallthru
        _
      %p302 = scmp.lt.s32.totalorder %s21, 6
      // Predicated region
      $region37: #{diff_jpeg_forward.1} parent=5 // pred_check
        %p303 = pneg %p302
      $region38: #{diff_jpeg_forward.1} parent=5 // pred_check_branch
        %305 = sbr.rel (%p303) target = $region40
      $region39: #{diff_jpeg_forward.1} parent=5 // pred_region
        // Predicated region
        $region41: #{diff_jpeg_forward.1} parent=39 // pred_check
          %p306 = pneg %p73
        $region42: #{diff_jpeg_forward.1} parent=39 // pred_check_branch
          %308 = sbr.rel (%p306) target = $region44
        $region43: #{diff_jpeg_forward.1} parent=39 // pred_region
          %s309 = sand.u32 %s63, 1
          %s310 = scalar_lea.sflag [#allocation3], %s309
          %s311 = sand.u32 %s63, 1
          %s312 = smul.addr %s311, 16
          %s313 = scalar_lea.vmem [#allocation2], %s312
          %s314 = smul.u32 2, %s30
          %s316 = ssub.s32 256, 256
          %317 = vsyncadd %s310, %s316
          %s318 = sadd.s32 %s31, %s314
          %s319 = smul.addr %s28, 2
          %s320 = sadd.s32 %s318, %s319
          %s321 = smul.addr %s29, 6
          %s322 = sadd.s32 %s320, %s321
          %s323 = smul.addr %s322, 128
          %s324 = scalar_lea.hbm %s0, %s323
          %s325 = sshll.u32 %s313, 4
          %s326 = int_to_ptr.vmem [resolvable:$true] %s325
          %331 = dma.hbm_to_vmem [thread:$0]  %s324, 256, %s326, %s310, 128, 128, 8
        $region44: #{diff_jpeg_forward.1} parent=39 // pred_fallthru
          _
      $region40: #{diff_jpeg_forward.1} parent=5 // pred_fallthru
        _
      %p332 = scmp.le.s32.totalorder 1, %s21
      %p333 = scmp.lt.s32.totalorder %s21, 7
      %p334 = pnand %p332, %p333
      %p335 = pneg %p334
      // Predicated region
      $region45: #{diff_jpeg_forward.1} parent=5 // pred_check
        _
      $region46: #{diff_jpeg_forward.1} parent=5 // pred_check_branch
        %337 = sbr.rel (%p334) target = $region48
      $region47: #{diff_jpeg_forward.1} parent=5 // pred_region
        %s338 = ssub.s32 %s21, 1
        %s339 = sand.u32 %s66, 1
        %s340 = scalar_lea.sflag [#allocation3], %s339
        %s341 = sand.u32 %s66, 1
        %s342 = smul.addr %s341, 16
        %s343 = scalar_lea.vmem [#allocation2], %s342
        // Predicated region
        $region49: #{diff_jpeg_forward.1} parent=47 // pred_check
          %p344 = pneg %p79
        $region50: #{diff_jpeg_forward.1} parent=47 // pred_check_branch
          %346 = sbr.rel (%p344) target = $region52
        $region51: #{diff_jpeg_forward.1} parent=47 // pred_region
          %347 = dma.done %s340, 256
        $region52: #{diff_jpeg_forward.1} parent=47 // pred_fallthru
          _
        %s348 = sand.u32 %s66, 1
        %s349 = scalar_lea.sflag [#allocation3], %s348
        %s350 = sand.u32 %s66, 1
        %s351 = smul.addr %s350, 16
        %s352 = scalar_lea.vmem [#allocation2], %s351
        %p353 = pneg %p79
        %p354 = pneg %p76
        %p355 = pneg %p100
        %p356 = pneg %p97
        %p357 = pneg %p121
        %p358 = pneg %p118
        %p359 = pneg %p142
        %p360 = pneg %p139
        %p361 = pneg %p163
        %p362 = pneg %p160
        %p363 = pneg %p184
        %p364 = pneg %p181
        %p365 = pneg %p205
        %p366 = pneg %p202
        %p367 = pneg %p237
        %p368 = pneg %p234
        %s369 = smul.u32 2, %s34
        %p370 = scmp.lt.s32.totalorder %s32, 2
        %s371 = scalar_select %p370, %s32, 2
        %p372 = scmp.lt.s32.totalorder %s33, 1
        %s373 = scalar_select %p372, %s33, 1
        %p374 = scmp.lt.s32.totalorder %s369, 1
        %s375 = scalar_select %p374, %s369, 1
        %p376 = scmp.lt.s32.totalorder %s35, 0
        %s377 = scalar_select %p376, %s35, 0
        %s378 = sadd.s32 %s377, %s375
        %s379 = smul.addr %s373, 2
        %s380 = sadd.s32 %s378, %s379
        %s381 = smul.addr %s371, 4
        %s382 = sadd.s32 %s380, %s381
        %s383 = smul.addr %s382, 8
        %s384 = scalar_lea.vmem %s7, %s383
        %p385 = pneg %p269
        %p386 = pneg %p266
        %s387 = sand.u32 %s256, 1
        %s388 = scalar_lea.sflag [#allocation4], %s387
        %s389 = sand.u32 %s256, 1
        %s390 = smul.addr %s389, 16
        %s391 = scalar_lea.vmem [#allocation5], %s390
        %s392 = smul.u32 2, %s34
        %s393 = smul.u32 2, %s34
        %p394 = scmp.lt.s32.totalorder %s32, 2
        %s395 = scalar_select %p394, %s32, 2
        %p396 = scmp.lt.s32.totalorder %s33, 1
        %s397 = scalar_select %p396, %s33, 1
        %p398 = scmp.lt.s32.totalorder %s393, 1
        %s399 = scalar_select %p398, %s393, 1
        %p400 = scmp.lt.s32.totalorder %s35, 0
        %s401 = scalar_select %p400, %s35, 0
        %s402 = sadd.s32 %s401, %s399
        %s403 = smul.addr %s397, 2
        %s404 = sadd.s32 %s402, %s403
        %s405 = smul.addr %s395, 4
        %s406 = sadd.s32 %s404, %s405
        %s407 = smul.addr %s406, 8
        %s408 = scalar_lea.vmem %s7, %s407
        %s409 = smul.u32 2, %s34
        %s410 = smul.u32 2, %s34
        %v411 = vld [vmem:[%s1] sm:$0xff]
        %v412 = vld [vmem:[%s1 + $0x8] sm:$0xff]
        %v413 = vld [vmem:[%s2] sm:$0xff]
        %v414 = vld [vmem:[%s2 + $0x8] sm:$0xff]
        %v415 = vld [vmem:[%s3] sm:$0xff]
        %v416 = vld [vmem:[%s3 + $0x8] sm:$0xff]
        %v417 = vld [vmem:[%s4] sm:$0xff]
        %v418 = vld [vmem:[%s4 + $0x8] sm:$0xff]
        %v419 = vld [vmem:[%s5] sm:$0xff]
        %v420 = vld [vmem:[%s5 + $0x8] sm:$0xff]
        %v421 = vld [vmem:[%s6] sm:$0xff]
        %v422 = vld [vmem:[%s6 + $0x8] sm:$0xff]
        %v423 = vld [vmem:[%s343] sm:$0xff]
        %v424 = vld [vmem:[%s343 + $0x8] sm:$0xff]
        %v425 = vmul.f32 %v423, 255.0
        %v426 = vmul.f32 %v424, 255.0
        %v427 = vsub.f32 %v425, 128.0
        %v428 = vsub.f32 %v426, 128.0
        %vm429 = vcmask 130048
        %v431 = vsel %vm429, %v411, 0
        %v434 = vsel %vm429, %v412, 0
        %436 = vmatprep.subr.mxu0 0.0
        %437 = vmatpush1.msra.mxu0 0.0
        %438 = vmatprep.subr.mxu0 0.0
        %439 = vmatpush1.msra.mxu0 0.0
        %440 = vmatprep.subr.mxu0 0.0
        %441 = vmatpush1.msra.mxu0 0.0
        %442 = vmatprep.subr.mxu0 0.0
        %443 = vmatpush1.msra.mxu0 0.0
        %444 = vmatprep.subr.mxu0 0.0
        %445 = vmatpush1.msra.mxu0 0.0
        %446 = vmatprep.subr.mxu0 0.0
        %447 = vmatpush1.msra.mxu0 0.0
        %448 = vmatprep.subr.mxu0 0.0
        %449 = vmatpush1.msra.mxu0 0.0
        %450 = vmatprep.subr.mxu0 0.0
        %451 = vmatpush1.msra.mxu0 0.0
        %452 = vmatprep.subr.mxu0 0.0
        %453 = vmatpush1.msra.mxu0 0.0
        %454 = vmatprep.subr.mxu0 0.0
        %455 = vmatpush1.msra.mxu0 0.0
        %456 = vmatprep.subr.mxu0 0.0
        %457 = vmatpush1.msra.mxu0 0.0
        %458 = vmatprep.subr.mxu0 0.0
        %459 = vmatpush1.msra.mxu0 0.0
        %460 = vmatprep.subr.mxu0 0.0
        %461 = vmatpush1.msra.mxu0 0.0
        %462 = vmatprep.subr.mxu0 0.0
        %463 = vmatpush1.msra.mxu0 0.0
        %464 = vmatprep.subr.mxu0 0.0
        %v465 = vand.u32 %v428, 4294901760
        %466 = vmatpush1.msra.mxu0 %v465
        %467 = vmatprep.subr.mxu0 0.0
        %v468 = vand.u32 %v427, 4294901760
        %469 = vmatpush1.msra.mxu0 %v468
        %470 = vmatprep.subr.mxu0 0.0
        %471 = vmatpush2.msra.mxu0 0.0
        %472 = vmatprep.subr.mxu0 0.0
        %473 = vmatpush2.msra.mxu0 0.0
        %474 = vmatprep.subr.mxu0 0.0
        %475 = vmatpush2.msra.mxu0 0.0
        %476 = vmatprep.subr.mxu0 0.0
        %477 = vmatpush2.msra.mxu0 0.0
        %478 = vmatprep.subr.mxu0 0.0
        %479 = vmatpush2.msra.mxu0 0.0
        %480 = vmatprep.subr.mxu0 0.0
        %481 = vmatpush2.msra.mxu0 0.0
        %482 = vmatprep.subr.mxu0 0.0
        %483 = vmatpush2.msra.mxu0 0.0
        %484 = vmatprep.subr.mxu0 0.0
        %485 = vmatpush2.msra.mxu0 0.0
        %486 = vmatprep.subr.mxu0 0.0
        %487 = vmatpush2.msra.mxu0 0.0
        %488 = vmatprep.subr.mxu0 0.0
        %489 = vmatpush2.msra.mxu0 0.0
        %490 = vmatprep.subr.mxu0 0.0
        %491 = vmatpush2.msra.mxu0 0.0
        %492 = vmatprep.subr.mxu0 0.0
        %493 = vmatpush2.msra.mxu0 0.0
        %494 = vmatprep.subr.mxu0 0.0
        %495 = vmatpush2.msra.mxu0 0.0
        %496 = vmatprep.subr.mxu0 0.0
        %497 = vmatpush2.msra.mxu0 0.0
        %498 = vmatprep.subr.mxu0 0.0
        %499 = vmatpush2.msra.mxu0 0.0
        %500 = vmatprep.subr.mxu0 0.0
        %501 = vmatpush2.msra.mxu0 0.0
        %502 = vmatprep.mubr.f32.mxu0 0.0
        %v503 = vand.u32 %v431, 4294901760
        %v504 = vsub.f32 %v431, %v503
        %v505 = vand.u32 %v504, 4294901760
        %v506 = vsub.f32 %v504, %v505
        %v507 = vand.u32 %v506, 4294901760
        %508 = vmatmul.mubr.f32.gmra.mxu0 %v507
        %v509 = vpop.f32.mrf.mxu0
        %v510 = vadd.f32 0.0, %v509
        %v511 = vpop.f32.mrf.mxu0
        %512 = vmatprep.mubr.f32.mxu0 0.0
        %v513 = vand.u32 %v434, 4294901760
        %v514 = vsub.f32 %v434, %v513
        %v515 = vand.u32 %v514, 4294901760
        %v516 = vsub.f32 %v514, %v515
        %v517 = vand.u32 %v516, 4294901760
        %518 = vmatmul.mubr.f32.gmra.mxu0 %v517
        %v519 = vpop.f32.mrf.mxu0
        %v520 = vadd.f32 0.0, %v519
        %v521 = vpop.f32.mrf.mxu0
        %522 = vdwg.mxu0
        %523 = vmatprep.subr.mxu0 0.0
        %524 = vmatpush1.msra.mxu0 0.0
        %525 = vmatprep.subr.mxu0 0.0
        %526 = vmatpush1.msra.mxu0 0.0
        %527 = vmatprep.subr.mxu0 0.0
        %528 = vmatpush1.msra.mxu0 0.0
        %529 = vmatprep.subr.mxu0 0.0
        %530 = vmatpush1.msra.mxu0 0.0
        %531 = vmatprep.subr.mxu0 0.0
        %532 = vmatpush1.msra.mxu0 0.0
        %533 = vmatprep.subr.mxu0 0.0
        %534 = vmatpush1.msra.mxu0 0.0
        %535 = vmatprep.subr.mxu0 0.0
        %536 = vmatpush1.msra.mxu0 0.0
        %537 = vmatprep.subr.mxu0 0.0
        %538 = vmatpush1.msra.mxu0 0.0
        %539 = vmatprep.subr.mxu0 0.0
        %540 = vmatpush1.msra.mxu0 0.0
        %541 = vmatprep.subr.mxu0 0.0
        %542 = vmatpush1.msra.mxu0 0.0
        %543 = vmatprep.subr.mxu0 0.0
        %544 = vmatpush1.msra.mxu0 0.0
        %545 = vmatprep.subr.mxu0 0.0
        %546 = vmatpush1.msra.mxu0 0.0
        %547 = vmatprep.subr.mxu0 0.0
        %548 = vmatpush1.msra.mxu0 0.0
        %549 = vmatprep.subr.mxu0 0.0
        %550 = vmatpush1.msra.mxu0 0.0
        %551 = vmatprep.subr.mxu0 0.0
        %v552 = vand.u32 %v428, 4294901760
        %v553 = vsub.f32 %v428, %v552
        %v554 = vand.u32 %v553, 4294901760
        %v555 = vsub.f32 %v553, %v554
        %v556 = vand.u32 %v555, 4294901760
        %557 = vmatpush1.msra.mxu0 %v556
        %558 = vmatprep.subr.mxu0 0.0
        %v559 = vand.u32 %v427, 4294901760
        %v560 = vsub.f32 %v427, %v559
        %v561 = vand.u32 %v560, 4294901760
        %v562 = vsub.f32 %v560, %v561
        %v563 = vand.u32 %v562, 4294901760
        %564 = vmatpush1.msra.mxu0 %v563
        %565 = vmatprep.subr.mxu0 0.0
        %566 = vmatpush2.msra.mxu0 0.0
        %567 = vmatprep.subr.mxu0 0.0
        %568 = vmatpush2.msra.mxu0 0.0
        %569 = vmatprep.subr.mxu0 0.0
        %570 = vmatpush2.msra.mxu0 0.0
        %571 = vmatprep.subr.mxu0 0.0
        %572 = vmatpush2.msra.mxu0 0.0
        %573 = vmatprep.subr.mxu0 0.0
        %574 = vmatpush2.msra.mxu0 0.0
        %575 = vmatprep.subr.mxu0 0.0
        %576 = vmatpush2.msra.mxu0 0.0
        %577 = vmatprep.subr.mxu0 0.0
        %578 = vmatpush2.msra.mxu0 0.0
        %579 = vmatprep.subr.mxu0 0.0
        %580 = vmatpush2.msra.mxu0 0.0
        %581 = vmatprep.subr.mxu0 0.0
        %582 = vmatpush2.msra.mxu0 0.0
        %583 = vmatprep.subr.mxu0 0.0
        %584 = vmatpush2.msra.mxu0 0.0
        %585 = vmatprep.subr.mxu0 0.0
        %586 = vmatpush2.msra.mxu0 0.0
        %587 = vmatprep.subr.mxu0 0.0
        %588 = vmatpush2.msra.mxu0 0.0
        %589 = vmatprep.subr.mxu0 0.0
        %590 = vmatpush2.msra.mxu0 0.0
        %591 = vmatprep.subr.mxu0 0.0
        %592 = vmatpush2.msra.mxu0 0.0
        %593 = vmatprep.subr.mxu0 0.0
        %594 = vmatpush2.msra.mxu0 0.0
        %595 = vmatprep.subr.mxu0 0.0
        %596 = vmatpush2.msra.mxu0 0.0
        %597 = vmatprep.mubr.f32.mxu0 0.0
        %v598 = vand.u32 %v431, 4294901760
        %599 = vmatmul.mubr.f32.gmra.mxu0 %v598
        %v600 = vpop.f32.mrf.mxu0
        %v601 = vadd.f32 %v510, %v600
        %v602 = vpop.f32.mrf.mxu0
        %603 = vmatprep.mubr.f32.mxu0 0.0
        %v604 = vand.u32 %v434, 4294901760
        %605 = vmatmul.mubr.f32.gmra.mxu0 %v604
        %v606 = vpop.f32.mrf.mxu0
        %v607 = vadd.f32 %v520, %v606
        %v608 = vpop.f32.mrf.mxu0
        %609 = vdwg.mxu0
        %610 = vmatprep.subr.mxu0 0.0
        %611 = vmatpush1.msra.mxu0 0.0
        %612 = vmatprep.subr.mxu0 0.0
        %613 = vmatpush1.msra.mxu0 0.0
        %614 = vmatprep.subr.mxu0 0.0
        %615 = vmatpush1.msra.mxu0 0.0
        %616 = vmatprep.subr.mxu0 0.0
        %617 = vmatpush1.msra.mxu0 0.0
        %618 = vmatprep.subr.mxu0 0.0
        %619 = vmatpush1.msra.mxu0 0.0
        %620 = vmatprep.subr.mxu0 0.0
        %621 = vmatpush1.msra.mxu0 0.0
        %622 = vmatprep.subr.mxu0 0.0
        %623 = vmatpush1.msra.mxu0 0.0
        %624 = vmatprep.subr.mxu0 0.0
        %625 = vmatpush1.msra.mxu0 0.0
        %626 = vmatprep.subr.mxu0 0.0
        %627 = vmatpush1.msra.mxu0 0.0
        %628 = vmatprep.subr.mxu0 0.0
        %629 = vmatpush1.msra.mxu0 0.0
        %630 = vmatprep.subr.mxu0 0.0
        %631 = vmatpush1.msra.mxu0 0.0
        %632 = vmatprep.subr.mxu0 0.0
        %633 = vmatpush1.msra.mxu0 0.0
        %634 = vmatprep.subr.mxu0 0.0
        %635 = vmatpush1.msra.mxu0 0.0
        %636 = vmatprep.subr.mxu0 0.0
        %637 = vmatpush1.msra.mxu0 0.0
        %638 = vmatprep.subr.mxu0 0.0
        %v639 = vand.u32 %v428, 4294901760
        %v640 = vsub.f32 %v428, %v639
        %641 = vmatpush1.msra.mxu0 %v640
        %642 = vmatprep.subr.mxu0 0.0
        %v643 = vand.u32 %v427, 4294901760
        %v644 = vsub.f32 %v427, %v643
        %645 = vmatpush1.msra.mxu0 %v644
        %646 = vmatprep.subr.mxu0 0.0
        %647 = vmatpush2.msra.mxu0 0.0
        %648 = vmatprep.subr.mxu0 0.0
        %649 = vmatpush2.msra.mxu0 0.0
        %650 = vmatprep.subr.mxu0 0.0
        %651 = vmatpush2.msra.mxu0 0.0
        %652 = vmatprep.subr.mxu0 0.0
        %653 = vmatpush2.msra.mxu0 0.0
        %654 = vmatprep.subr.mxu0 0.0
        %655 = vmatpush2.msra.mxu0 0.0
        %656 = vmatprep.subr.mxu0 0.0
        %657 = vmatpush2.msra.mxu0 0.0
        %658 = vmatprep.subr.mxu0 0.0
        %659 = vmatpush2.msra.mxu0 0.0
        %660 = vmatprep.subr.mxu0 0.0
        %661 = vmatpush2.msra.mxu0 0.0
        %662 = vmatprep.subr.mxu0 0.0
        %663 = vmatpush2.msra.mxu0 0.0
        %664 = vmatprep.subr.mxu0 0.0
        %665 = vmatpush2.msra.mxu0 0.0
        %666 = vmatprep.subr.mxu0 0.0
        %667 = vmatpush2.msra.mxu0 0.0
        %668 = vmatprep.subr.mxu0 0.0
        %669 = vmatpush2.msra.mxu0 0.0
        %670 = vmatprep.subr.mxu0 0.0
        %671 = vmatpush2.msra.mxu0 0.0
        %672 = vmatprep.subr.mxu0 0.0
        %673 = vmatpush2.msra.mxu0 0.0
        %674 = vmatprep.subr.mxu0 0.0
        %675 = vmatpush2.msra.mxu0 0.0
        %676 = vmatprep.subr.mxu0 0.0
        %677 = vmatpush2.msra.mxu0 0.0
        %678 = vmatprep.mubr.f32.mxu0 0.0
        %v679 = vand.u32 %v431, 4294901760
        %v680 = vsub.f32 %v431, %v679
        %681 = vmatmul.mubr.f32.gmra.mxu0 %v680
        %v682 = vpop.f32.mrf.mxu0
        %v683 = vadd.f32 %v601, %v682
        %v684 = vpop.f32.mrf.mxu0
        %685 = vmatprep.mubr.f32.mxu0 0.0
        %v686 = vand.u32 %v434, 4294901760
        %v687 = vsub.f32 %v434, %v686
        %688 = vmatmul.mubr.f32.gmra.mxu0 %v687
        %v689 = vpop.f32.mrf.mxu0
        %v690 = vadd.f32 %v607, %v689
        %v691 = vpop.f32.mrf.mxu0
        %692 = vdwg.mxu0
        %693 = vmatprep.subr.mxu0 0.0
        %694 = vmatpush1.msra.mxu0 0.0
        %695 = vmatprep.subr.mxu0 0.0
        %696 = vmatpush1.msra.mxu0 0.0
        %697 = vmatprep.subr.mxu0 0.0
        %698 = vmatpush1.msra.mxu0 0.0
        %699 = vmatprep.subr.mxu0 0.0
        %700 = vmatpush1.msra.mxu0 0.0
        %701 = vmatprep.subr.mxu0 0.0
        %702 = vmatpush1.msra.mxu0 0.0
        %703 = vmatprep.subr.mxu0 0.0
        %704 = vmatpush1.msra.mxu0 0.0
        %705 = vmatprep.subr.mxu0 0.0
        %706 = vmatpush1.msra.mxu0 0.0
        %707 = vmatprep.subr.mxu0 0.0
        %708 = vmatpush1.msra.mxu0 0.0
        %709 = vmatprep.subr.mxu0 0.0
        %710 = vmatpush1.msra.mxu0 0.0
        %711 = vmatprep.subr.mxu0 0.0
        %712 = vmatpush1.msra.mxu0 0.0
        %713 = vmatprep.subr.mxu0 0.0
        %714 = vmatpush1.msra.mxu0 0.0
        %715 = vmatprep.subr.mxu0 0.0
        %716 = vmatpush1.msra.mxu0 0.0
        %717 = vmatprep.subr.mxu0 0.0
        %718 = vmatpush1.msra.mxu0 0.0
        %719 = vmatprep.subr.mxu0 0.0
        %720 = vmatpush1.msra.mxu0 0.0
        %721 = vmatprep.subr.mxu0 0.0
        %v722 = vand.u32 %v428, 4294901760
        %723 = vmatpush1.msra.mxu0 %v722
        %724 = vmatprep.subr.mxu0 0.0
        %v725 = vand.u32 %v427, 4294901760
        %726 = vmatpush1.msra.mxu0 %v725
        %727 = vmatprep.subr.mxu0 0.0
        %728 = vmatpush2.msra.mxu0 0.0
        %729 = vmatprep.subr.mxu0 0.0
        %730 = vmatpush2.msra.mxu0 0.0
        %731 = vmatprep.subr.mxu0 0.0
        %732 = vmatpush2.msra.mxu0 0.0
        %733 = vmatprep.subr.mxu0 0.0
        %734 = vmatpush2.msra.mxu0 0.0
        %735 = vmatprep.subr.mxu0 0.0
        %736 = vmatpush2.msra.mxu0 0.0
        %737 = vmatprep.subr.mxu0 0.0
        %738 = vmatpush2.msra.mxu0 0.0
        %739 = vmatprep.subr.mxu0 0.0
        %740 = vmatpush2.msra.mxu0 0.0
        %741 = vmatprep.subr.mxu0 0.0
        %742 = vmatpush2.msra.mxu0 0.0
        %743 = vmatprep.subr.mxu0 0.0
        %744 = vmatpush2.msra.mxu0 0.0
        %745 = vmatprep.subr.mxu0 0.0
        %746 = vmatpush2.msra.mxu0 0.0
        %747 = vmatprep.subr.mxu0 0.0
        %748 = vmatpush2.msra.mxu0 0.0
        %749 = vmatprep.subr.mxu0 0.0
        %750 = vmatpush2.msra.mxu0 0.0
        %751 = vmatprep.subr.mxu0 0.0
        %752 = vmatpush2.msra.mxu0 0.0
        %753 = vmatprep.subr.mxu0 0.0
        %754 = vmatpush2.msra.mxu0 0.0
        %755 = vmatprep.subr.mxu0 0.0
        %756 = vmatpush2.msra.mxu0 0.0
        %757 = vmatprep.subr.mxu0 0.0
        %758 = vmatpush2.msra.mxu0 0.0
        %759 = vmatprep.mubr.f32.mxu0 0.0
        %v760 = vand.u32 %v431, 4294901760
        %v761 = vsub.f32 %v431, %v760
        %v762 = vand.u32 %v761, 4294901760
        %763 = vmatmul.mubr.f32.gmra.mxu0 %v762
        %v764 = vpop.f32.mrf.mxu0
        %v765 = vadd.f32 %v683, %v764
        %v766 = vpop.f32.mrf.mxu0
        %767 = vmatprep.mubr.f32.mxu0 0.0
        %v768 = vand.u32 %v434, 4294901760
        %v769 = vsub.f32 %v434, %v768
        %v770 = vand.u32 %v769, 4294901760
        %771 = vmatmul.mubr.f32.gmra.mxu0 %v770
        %v772 = vpop.f32.mrf.mxu0
        %v773 = vadd.f32 %v690, %v772
        %v774 = vpop.f32.mrf.mxu0
        %775 = vdwg.mxu0
        %776 = vmatprep.subr.mxu0 0.0
        %777 = vmatpush1.msra.mxu0 0.0
        %778 = vmatprep.subr.mxu0 0.0
        %779 = vmatpush1.msra.mxu0 0.0
        %780 = vmatprep.subr.mxu0 0.0
        %781 = vmatpush1.msra.mxu0 0.0
        %782 = vmatprep.subr.mxu0 0.0
        %783 = vmatpush1.msra.mxu0 0.0
        %784 = vmatprep.subr.mxu0 0.0
        %785 = vmatpush1.msra.mxu0 0.0
        %786 = vmatprep.subr.mxu0 0.0
        %787 = vmatpush1.msra.mxu0 0.0
        %788 = vmatprep.subr.mxu0 0.0
        %789 = vmatpush1.msra.mxu0 0.0
        %790 = vmatprep.subr.mxu0 0.0
        %791 = vmatpush1.msra.mxu0 0.0
        %792 = vmatprep.subr.mxu0 0.0
        %793 = vmatpush1.msra.mxu0 0.0
        %794 = vmatprep.subr.mxu0 0.0
        %795 = vmatpush1.msra.mxu0 0.0
        %796 = vmatprep.subr.mxu0 0.0
        %797 = vmatpush1.msra.mxu0 0.0
        %798 = vmatprep.subr.mxu0 0.0
        %799 = vmatpush1.msra.mxu0 0.0
        %800 = vmatprep.subr.mxu0 0.0
        %801 = vmatpush1.msra.mxu0 0.0
        %802 = vmatprep.subr.mxu0 0.0
        %803 = vmatpush1.msra.mxu0 0.0
        %804 = vmatprep.subr.mxu0 0.0
        %v805 = vand.u32 %v428, 4294901760
        %v806 = vsub.f32 %v428, %v805
        %v807 = vand.u32 %v806, 4294901760
        %808 = vmatpush1.msra.mxu0 %v807
        %809 = vmatprep.subr.mxu0 0.0
        %v810 = vand.u32 %v427, 4294901760
        %v811 = vsub.f32 %v427, %v810
        %v812 = vand.u32 %v811, 4294901760
        %813 = vmatpush1.msra.mxu0 %v812
        %814 = vmatprep.subr.mxu0 0.0
        %815 = vmatpush2.msra.mxu0 0.0
        %816 = vmatprep.subr.mxu0 0.0
        %817 = vmatpush2.msra.mxu0 0.0
        %818 = vmatprep.subr.mxu0 0.0
        %819 = vmatpush2.msra.mxu0 0.0
        %820 = vmatprep.subr.mxu0 0.0
        %821 = vmatpush2.msra.mxu0 0.0
        %822 = vmatprep.subr.mxu0 0.0
        %823 = vmatpush2.msra.mxu0 0.0
        %824 = vmatprep.subr.mxu0 0.0
        %825 = vmatpush2.msra.mxu0 0.0
        %826 = vmatprep.subr.mxu0 0.0
        %827 = vmatpush2.msra.mxu0 0.0
        %828 = vmatprep.subr.mxu0 0.0
        %829 = vmatpush2.msra.mxu0 0.0
        %830 = vmatprep.subr.mxu0 0.0
        %831 = vmatpush2.msra.mxu0 0.0
        %832 = vmatprep.subr.mxu0 0.0
        %833 = vmatpush2.msra.mxu0 0.0
        %834 = vmatprep.subr.mxu0 0.0
        %835 = vmatpush2.msra.mxu0 0.0
        %836 = vmatprep.subr.mxu0 0.0
        %837 = vmatpush2.msra.mxu0 0.0
        %838 = vmatprep.subr.mxu0 0.0
        %839 = vmatpush2.msra.mxu0 0.0
        %840 = vmatprep.subr.mxu0 0.0
        %841 = vmatpush2.msra.mxu0 0.0
        %842 = vmatprep.subr.mxu0 0.0
        %843 = vmatpush2.msra.mxu0 0.0
        %844 = vmatprep.subr.mxu0 0.0
        %845 = vmatpush2.msra.mxu0 0.0
        %846 = vmatprep.mubr.f32.mxu0 0.0
        %v847 = vand.u32 %v431, 4294901760
        %848 = vmatmul.mubr.f32.gmra.mxu0 %v847
        %v849 = vpop.f32.mrf.mxu0
        %v850 = vadd.f32 %v765, %v849
        %v851 = vpop.f32.mrf.mxu0
        %852 = vmatprep.mubr.f32.mxu0 0.0
        %v853 = vand.u32 %v434, 4294901760
        %854 = vmatmul.mubr.f32.gmra.mxu0 %v853
        %v855 = vpop.f32.mrf.mxu0
        %v856 = vadd.f32 %v773, %v855
        %v857 = vpop.f32.mrf.mxu0
        %858 = vdwg.mxu0
        %859 = vmatprep.subr.mxu0 0.0
        %860 = vmatpush1.msra.mxu0 0.0
        %861 = vmatprep.subr.mxu0 0.0
        %862 = vmatpush1.msra.mxu0 0.0
        %863 = vmatprep.subr.mxu0 0.0
        %864 = vmatpush1.msra.mxu0 0.0
        %865 = vmatprep.subr.mxu0 0.0
        %866 = vmatpush1.msra.mxu0 0.0
        %867 = vmatprep.subr.mxu0 0.0
        %868 = vmatpush1.msra.mxu0 0.0
        %869 = vmatprep.subr.mxu0 0.0
        %870 = vmatpush1.msra.mxu0 0.0
        %871 = vmatprep.subr.mxu0 0.0
        %872 = vmatpush1.msra.mxu0 0.0
        %873 = vmatprep.subr.mxu0 0.0
        %874 = vmatpush1.msra.mxu0 0.0
        %875 = vmatprep.subr.mxu0 0.0
        %876 = vmatpush1.msra.mxu0 0.0
        %877 = vmatprep.subr.mxu0 0.0
        %878 = vmatpush1.msra.mxu0 0.0
        %879 = vmatprep.subr.mxu0 0.0
        %880 = vmatpush1.msra.mxu0 0.0
        %881 = vmatprep.subr.mxu0 0.0
        %882 = vmatpush1.msra.mxu0 0.0
        %883 = vmatprep.subr.mxu0 0.0
        %884 = vmatpush1.msra.mxu0 0.0
        %885 = vmatprep.subr.mxu0 0.0
        %886 = vmatpush1.msra.mxu0 0.0
        %887 = vmatprep.subr.mxu0 0.0
        %v888 = vand.u32 %v428, 4294901760
        %889 = vmatpush1.msra.mxu0 %v888
        %890 = vmatprep.subr.mxu0 0.0
        %v891 = vand.u32 %v427, 4294901760
        %892 = vmatpush1.msra.mxu0 %v891
        %893 = vmatprep.subr.mxu0 0.0
        %894 = vmatpush2.msra.mxu0 0.0
        %895 = vmatprep.subr.mxu0 0.0
        %896 = vmatpush2.msra.mxu0 0.0
        %897 = vmatprep.subr.mxu0 0.0
        %898 = vmatpush2.msra.mxu0 0.0
        %899 = vmatprep.subr.mxu0 0.0
        %900 = vmatpush2.msra.mxu0 0.0
        %901 = vmatprep.subr.mxu0 0.0
        %902 = vmatpush2.msra.mxu0 0.0
        %903 = vmatprep.subr.mxu0 0.0
        %904 = vmatpush2.msra.mxu0 0.0
        %905 = vmatprep.subr.mxu0 0.0
        %906 = vmatpush2.msra.mxu0 0.0
        %907 = vmatprep.subr.mxu0 0.0
        %908 = vmatpush2.msra.mxu0 0.0
        %909 = vmatprep.subr.mxu0 0.0
        %910 = vmatpush2.msra.mxu0 0.0
        %911 = vmatprep.subr.mxu0 0.0
        %912 = vmatpush2.msra.mxu0 0.0
        %913 = vmatprep.subr.mxu0 0.0
        %914 = vmatpush2.msra.mxu0 0.0
        %915 = vmatprep.subr.mxu0 0.0
        %916 = vmatpush2.msra.mxu0 0.0
        %917 = vmatprep.subr.mxu0 0.0
        %918 = vmatpush2.msra.mxu0 0.0
        %919 = vmatprep.subr.mxu0 0.0
        %920 = vmatpush2.msra.mxu0 0.0
        %921 = vmatprep.subr.mxu0 0.0
        %922 = vmatpush2.msra.mxu0 0.0
        %923 = vmatprep.subr.mxu0 0.0
        %924 = vmatpush2.msra.mxu0 0.0
        %925 = vmatprep.mubr.f32.mxu0 0.0
        %v926 = vand.u32 %v431, 4294901760
        %927 = vmatmul.mubr.f32.gmra.mxu0 %v926
        %v928 = vpop.f32.mrf.mxu0
        %v929 = vadd.f32 %v850, %v928
        %v930 = vpop.f32.mrf.mxu0
        %931 = vmatprep.mubr.f32.mxu0 0.0
        %v932 = vand.u32 %v434, 4294901760
        %933 = vmatmul.mubr.f32.gmra.mxu0 %v932
        %v934 = vpop.f32.mrf.mxu0
        %v935 = vadd.f32 %v856, %v934
        %v936 = vpop.f32.mrf.mxu0
        %937 = vdwg.mxu0
        %v939 = vsel %vm429, %v929, 0
        %v942 = vsel %vm429, %v935, 0
        %944 = vmatprep.subr.mxu0 0.0
        %945 = vmatpush1.msra.mxu0 0.0
        %946 = vmatprep.subr.mxu0 0.0
        %947 = vmatpush1.msra.mxu0 0.0
        %948 = vmatprep.subr.mxu0 0.0
        %949 = vmatpush1.msra.mxu0 0.0
        %950 = vmatprep.subr.mxu0 0.0
        %951 = vmatpush1.msra.mxu0 0.0
        %952 = vmatprep.subr.mxu0 0.0
        %953 = vmatpush1.msra.mxu0 0.0
        %954 = vmatprep.subr.mxu0 0.0
        %955 = vmatpush1.msra.mxu0 0.0
        %956 = vmatprep.subr.mxu0 0.0
        %957 = vmatpush1.msra.mxu0 0.0
        %958 = vmatprep.subr.mxu0 0.0
        %959 = vmatpush1.msra.mxu0 0.0
        %960 = vmatprep.subr.mxu0 0.0
        %961 = vmatpush1.msra.mxu0 0.0
        %962 = vmatprep.subr.mxu0 0.0
        %963 = vmatpush1.msra.mxu0 0.0
        %964 = vmatprep.subr.mxu0 0.0
        %965 = vmatpush1.msra.mxu0 0.0
        %966 = vmatprep.subr.mxu0 0.0
        %967 = vmatpush1.msra.mxu0 0.0
        %968 = vmatprep.subr.mxu0 0.0
        %969 = vmatpush1.msra.mxu0 0.0
        %970 = vmatprep.subr.mxu0 0.0
        %971 = vmatpush1.msra.mxu0 0.0
        %972 = vmatprep.subr.mxu0 0.0
        %v973 = vand.u32 %v416, 4294901760
        %974 = vmatpush1.msra.mxu0 %v973
        %975 = vmatprep.subr.mxu0 0.0
        %v976 = vand.u32 %v415, 4294901760
        %977 = vmatpush1.msra.mxu0 %v976
        %978 = vmatprep.subr.mxu0 0.0
        %979 = vmatpush2.msra.mxu0 0.0
        %980 = vmatprep.subr.mxu0 0.0
        %981 = vmatpush2.msra.mxu0 0.0
        %982 = vmatprep.subr.mxu0 0.0
        %983 = vmatpush2.msra.mxu0 0.0
        %984 = vmatprep.subr.mxu0 0.0
        %985 = vmatpush2.msra.mxu0 0.0
        %986 = vmatprep.subr.mxu0 0.0
        %987 = vmatpush2.msra.mxu0 0.0
        %988 = vmatprep.subr.mxu0 0.0
        %989 = vmatpush2.msra.mxu0 0.0
        %990 = vmatprep.subr.mxu0 0.0
        %991 = vmatpush2.msra.mxu0 0.0
        %992 = vmatprep.subr.mxu0 0.0
        %993 = vmatpush2.msra.mxu0 0.0
        %994 = vmatprep.subr.mxu0 0.0
        %995 = vmatpush2.msra.mxu0 0.0
        %996 = vmatprep.subr.mxu0 0.0
        %997 = vmatpush2.msra.mxu0 0.0
        %998 = vmatprep.subr.mxu0 0.0
        %999 = vmatpush2.msra.mxu0 0.0
        %1000 = vmatprep.subr.mxu0 0.0
        %1001 = vmatpush2.msra.mxu0 0.0
        %1002 = vmatprep.subr.mxu0 0.0
        %1003 = vmatpush2.msra.mxu0 0.0
        %1004 = vmatprep.subr.mxu0 0.0
        %1005 = vmatpush2.msra.mxu0 0.0
        %1006 = vmatprep.subr.mxu0 0.0
        %1007 = vmatpush2.msra.mxu0 0.0
        %1008 = vmatprep.subr.mxu0 0.0
        %1009 = vmatpush2.msra.mxu0 0.0
        %1010 = vmatprep.mubr.f32.mxu0 0.0
        %v1011 = vand.u32 %v939, 4294901760
        %v1012 = vsub.f32 %v939, %v1011
        %v1013 = vand.u32 %v1012, 4294901760
        %v1014 = vsub.f32 %v1012, %v1013
        %v1015 = vand.u32 %v1014, 4294901760
        %1016 = vmatmul.mubr.f32.gmra.mxu0 %v1015
        %v1017 = vpop.f32.mrf.mxu0
        %v1018 = vadd.f32 0.0, %v1017
        %v1019 = vpop.f32.mrf.mxu0
        %1020 = vmatprep.mubr.f32.mxu0 0.0
        %v1021 = vand.u32 %v942, 4294901760
        %v1022 = vsub.f32 %v942, %v1021
        %v1023 = vand.u32 %v1022, 4294901760
        %v1024 = vsub.f32 %v1022, %v1023
        %v1025 = vand.u32 %v1024, 4294901760
        %1026 = vmatmul.mubr.f32.gmra.mxu0 %v1025
        %v1027 = vpop.f32.mrf.mxu0
        %v1028 = vadd.f32 0.0, %v1027
        %v1029 = vpop.f32.mrf.mxu0
        %1030 = vdwg.mxu0
        %1031 = vmatprep.subr.mxu0 0.0
        %1032 = vmatpush1.msra.mxu0 0.0
        %1033 = vmatprep.subr.mxu0 0.0
        %1034 = vmatpush1.msra.mxu0 0.0
        %1035 = vmatprep.subr.mxu0 0.0
        %1036 = vmatpush1.msra.mxu0 0.0
        %1037 = vmatprep.subr.mxu0 0.0
        %1038 = vmatpush1.msra.mxu0 0.0
        %1039 = vmatprep.subr.mxu0 0.0
        %1040 = vmatpush1.msra.mxu0 0.0
        %1041 = vmatprep.subr.mxu0 0.0
        %1042 = vmatpush1.msra.mxu0 0.0
        %1043 = vmatprep.subr.mxu0 0.0
        %1044 = vmatpush1.msra.mxu0 0.0
        %1045 = vmatprep.subr.mxu0 0.0
        %1046 = vmatpush1.msra.mxu0 0.0
        %1047 = vmatprep.subr.mxu0 0.0
        %1048 = vmatpush1.msra.mxu0 0.0
        %1049 = vmatprep.subr.mxu0 0.0
        %1050 = vmatpush1.msra.mxu0 0.0
        %1051 = vmatprep.subr.mxu0 0.0
        %1052 = vmatpush1.msra.mxu0 0.0
        %1053 = vmatprep.subr.mxu0 0.0
        %1054 = vmatpush1.msra.mxu0 0.0
        %1055 = vmatprep.subr.mxu0 0.0
        %1056 = vmatpush1.msra.mxu0 0.0
        %1057 = vmatprep.subr.mxu0 0.0
        %1058 = vmatpush1.msra.mxu0 0.0
        %1059 = vmatprep.subr.mxu0 0.0
        %v1060 = vand.u32 %v416, 4294901760
        %v1061 = vsub.f32 %v416, %v1060
        %v1062 = vand.u32 %v1061, 4294901760
        %v1063 = vsub.f32 %v1061, %v1062
        %v1064 = vand.u32 %v1063, 4294901760
        %1065 = vmatpush1.msra.mxu0 %v1064
        %1066 = vmatprep.subr.mxu0 0.0
        %v1067 = vand.u32 %v415, 4294901760
        %v1068 = vsub.f32 %v415, %v1067
        %v1069 = vand.u32 %v1068, 4294901760
        %v1070 = vsub.f32 %v1068, %v1069
        %v1071 = vand.u32 %v1070, 4294901760
        %1072 = vmatpush1.msra.mxu0 %v1071
        %1073 = vmatprep.subr.mxu0 0.0
        %1074 = vmatpush2.msra.mxu0 0.0
        %1075 = vmatprep.subr.mxu0 0.0
        %1076 = vmatpush2.msra.mxu0 0.0
        %1077 = vmatprep.subr.mxu0 0.0
        %1078 = vmatpush2.msra.mxu0 0.0
        %1079 = vmatprep.subr.mxu0 0.0
        %1080 = vmatpush2.msra.mxu0 0.0
        %1081 = vmatprep.subr.mxu0 0.0
        %1082 = vmatpush2.msra.mxu0 0.0
        %1083 = vmatprep.subr.mxu0 0.0
        %1084 = vmatpush2.msra.mxu0 0.0
        %1085 = vmatprep.subr.mxu0 0.0
        %1086 = vmatpush2.msra.mxu0 0.0
        %1087 = vmatprep.subr.mxu0 0.0
        %1088 = vmatpush2.msra.mxu0 0.0
        %1089 = vmatprep.subr.mxu0 0.0
        %1090 = vmatpush2.msra.mxu0 0.0
        %1091 = vmatprep.subr.mxu0 0.0
        %1092 = vmatpush2.msra.mxu0 0.0
        %1093 = vmatprep.subr.mxu0 0.0
        %1094 = vmatpush2.msra.mxu0 0.0
        %1095 = vmatprep.subr.mxu0 0.0
        %1096 = vmatpush2.msra.mxu0 0.0
        %1097 = vmatprep.subr.mxu0 0.0
        %1098 = vmatpush2.msra.mxu0 0.0
        %1099 = vmatprep.subr.mxu0 0.0
        %1100 = vmatpush2.msra.mxu0 0.0
        %1101 = vmatprep.subr.mxu0 0.0
        %1102 = vmatpush2.msra.mxu0 0.0
        %1103 = vmatprep.subr.mxu0 0.0
        %1104 = vmatpush2.msra.mxu0 0.0
        %1105 = vmatprep.mubr.f32.mxu0 0.0
        %v1106 = vand.u32 %v939, 4294901760
        %1107 = vmatmul.mubr.f32.gmra.mxu0 %v1106
        %v1108 = vpop.f32.mrf.mxu0
        %v1109 = vadd.f32 %v1018, %v1108
        %v1110 = vpop.f32.mrf.mxu0
        %1111 = vmatprep.mubr.f32.mxu0 0.0
        %v1112 = vand.u32 %v942, 4294901760
        %1113 = vmatmul.mubr.f32.gmra.mxu0 %v1112
        %v1114 = vpop.f32.mrf.mxu0
        %v1115 = vadd.f32 %v1028, %v1114
        %v1116 = vpop.f32.mrf.mxu0
        %1117 = vdwg.mxu0
        %1118 = vmatprep.subr.mxu0 0.0
        %1119 = vmatpush1.msra.mxu0 0.0
        %1120 = vmatprep.subr.mxu0 0.0
        %1121 = vmatpush1.msra.mxu0 0.0
        %1122 = vmatprep.subr.mxu0 0.0
        %1123 = vmatpush1.msra.mxu0 0.0
        %1124 = vmatprep.subr.mxu0 0.0
        %1125 = vmatpush1.msra.mxu0 0.0
        %1126 = vmatprep.subr.mxu0 0.0
        %1127 = vmatpush1.msra.mxu0 0.0
        %1128 = vmatprep.subr.mxu0 0.0
        %1129 = vmatpush1.msra.mxu0 0.0
        %1130 = vmatprep.subr.mxu0 0.0
        %1131 = vmatpush1.msra.mxu0 0.0
        %1132 = vmatprep.subr.mxu0 0.0
        %1133 = vmatpush1.msra.mxu0 0.0
        %1134 = vmatprep.subr.mxu0 0.0
        %1135 = vmatpush1.msra.mxu0 0.0
        %1136 = vmatprep.subr.mxu0 0.0
        %1137 = vmatpush1.msra.mxu0 0.0
        %1138 = vmatprep.subr.mxu0 0.0
        %1139 = vmatpush1.msra.mxu0 0.0
        %1140 = vmatprep.subr.mxu0 0.0
        %1141 = vmatpush1.msra.mxu0 0.0
        %1142 = vmatprep.subr.mxu0 0.0
        %1143 = vmatpush1.msra.mxu0 0.0
        %1144 = vmatprep.subr.mxu0 0.0
        %1145 = vmatpush1.msra.mxu0 0.0
        %1146 = vmatprep.subr.mxu0 0.0
        %v1147 = vand.u32 %v416, 4294901760
        %v1148 = vsub.f32 %v416, %v1147
        %1149 = vmatpush1.msra.mxu0 %v1148
        %1150 = vmatprep.subr.mxu0 0.0
        %v1151 = vand.u32 %v415, 4294901760
        %v1152 = vsub.f32 %v415, %v1151
        %1153 = vmatpush1.msra.mxu0 %v1152
        %1154 = vmatprep.subr.mxu0 0.0
        %1155 = vmatpush2.msra.mxu0 0.0
        %1156 = vmatprep.subr.mxu0 0.0
        %1157 = vmatpush2.msra.mxu0 0.0
        %1158 = vmatprep.subr.mxu0 0.0
        %1159 = vmatpush2.msra.mxu0 0.0
        %1160 = vmatprep.subr.mxu0 0.0
        %1161 = vmatpush2.msra.mxu0 0.0
        %1162 = vmatprep.subr.mxu0 0.0
        %1163 = vmatpush2.msra.mxu0 0.0
        %1164 = vmatprep.subr.mxu0 0.0
        %1165 = vmatpush2.msra.mxu0 0.0
        %1166 = vmatprep.subr.mxu0 0.0
        %1167 = vmatpush2.msra.mxu0 0.0
        %1168 = vmatprep.subr.mxu0 0.0
        %1169 = vmatpush2.msra.mxu0 0.0
        %1170 = vmatprep.subr.mxu0 0.0
        %1171 = vmatpush2.msra.mxu0 0.0
        %1172 = vmatprep.subr.mxu0 0.0
        %1173 = vmatpush2.msra.mxu0 0.0
        %1174 = vmatprep.subr.mxu0 0.0
        %1175 = vmatpush2.msra.mxu0 0.0
        %1176 = vmatprep.subr.mxu0 0.0
        %1177 = vmatpush2.msra.mxu0 0.0
        %1178 = vmatprep.subr.mxu0 0.0
        %1179 = vmatpush2.msra.mxu0 0.0
        %1180 = vmatprep.subr.mxu0 0.0
        %1181 = vmatpush2.msra.mxu0 0.0
        %1182 = vmatprep.subr.mxu0 0.0
        %1183 = vmatpush2.msra.mxu0 0.0
        %1184 = vmatprep.subr.mxu0 0.0
        %1185 = vmatpush2.msra.mxu0 0.0
        %1186 = vmatprep.mubr.f32.mxu0 0.0
        %v1187 = vand.u32 %v939, 4294901760
        %v1188 = vsub.f32 %v939, %v1187
        %1189 = vmatmul.mubr.f32.gmra.mxu0 %v1188
        %v1190 = vpop.f32.mrf.mxu0
        %v1191 = vadd.f32 %v1109, %v1190
        %v1192 = vpop.f32.mrf.mxu0
        %1193 = vmatprep.mubr.f32.mxu0 0.0
        %v1194 = vand.u32 %v942, 4294901760
        %v1195 = vsub.f32 %v942, %v1194
        %1196 = vmatmul.mubr.f32.gmra.mxu0 %v1195
        %v1197 = vpop.f32.mrf.mxu0
        %v1198 = vadd.f32 %v1115, %v1197
        %v1199 = vpop.f32.mrf.mxu0
        %1200 = vdwg.mxu0
        %1201 = vmatprep.subr.mxu0 0.0
        %1202 = vmatpush1.msra.mxu0 0.0
        %1203 = vmatprep.subr.mxu0 0.0
        %1204 = vmatpush1.msra.mxu0 0.0
        %1205 = vmatprep.subr.mxu0 0.0
        %1206 = vmatpush1.msra.mxu0 0.0
        %1207 = vmatprep.subr.mxu0 0.0
        %1208 = vmatpush1.msra.mxu0 0.0
        %1209 = vmatprep.subr.mxu0 0.0
        %1210 = vmatpush1.msra.mxu0 0.0
        %1211 = vmatprep.subr.mxu0 0.0
        %1212 = vmatpush1.msra.mxu0 0.0
        %1213 = vmatprep.subr.mxu0 0.0
        %1214 = vmatpush1.msra.mxu0 0.0
        %1215 = vmatprep.subr.mxu0 0.0
        %1216 = vmatpush1.msra.mxu0 0.0
        %1217 = vmatprep.subr.mxu0 0.0
        %1218 = vmatpush1.msra.mxu0 0.0
        %1219 = vmatprep.subr.mxu0 0.0
        %1220 = vmatpush1.msra.mxu0 0.0
        %1221 = vmatprep.subr.mxu0 0.0
        %1222 = vmatpush1.msra.mxu0 0.0
        %1223 = vmatprep.subr.mxu0 0.0
        %1224 = vmatpush1.msra.mxu0 0.0
        %1225 = vmatprep.subr.mxu0 0.0
        %1226 = vmatpush1.msra.mxu0 0.0
        %1227 = vmatprep.subr.mxu0 0.0
        %1228 = vmatpush1.msra.mxu0 0.0
        %1229 = vmatprep.subr.mxu0 0.0
        %v1230 = vand.u32 %v416, 4294901760
        %1231 = vmatpush1.msra.mxu0 %v1230
        %1232 = vmatprep.subr.mxu0 0.0
        %v1233 = vand.u32 %v415, 4294901760
        %1234 = vmatpush1.msra.mxu0 %v1233
        %1235 = vmatprep.subr.mxu0 0.0
        %1236 = vmatpush2.msra.mxu0 0.0
        %1237 = vmatprep.subr.mxu0 0.0
        %1238 = vmatpush2.msra.mxu0 0.0
        %1239 = vmatprep.subr.mxu0 0.0
        %1240 = vmatpush2.msra.mxu0 0.0
        %1241 = vmatprep.subr.mxu0 0.0
        %1242 = vmatpush2.msra.mxu0 0.0
        %1243 = vmatprep.subr.mxu0 0.0
        %1244 = vmatpush2.msra.mxu0 0.0
        %1245 = vmatprep.subr.mxu0 0.0
        %1246 = vmatpush2.msra.mxu0 0.0
        %1247 = vmatprep.subr.mxu0 0.0
        %1248 = vmatpush2.msra.mxu0 0.0
        %1249 = vmatprep.subr.mxu0 0.0
        %1250 = vmatpush2.msra.mxu0 0.0
        %1251 = vmatprep.subr.mxu0 0.0
        %1252 = vmatpush2.msra.mxu0 0.0
        %1253 = vmatprep.subr.mxu0 0.0
        %1254 = vmatpush2.msra.mxu0 0.0
        %1255 = vmatprep.subr.mxu0 0.0
        %1256 = vmatpush2.msra.mxu0 0.0
        %1257 = vmatprep.subr.mxu0 0.0
        %1258 = vmatpush2.msra.mxu0 0.0
        %1259 = vmatprep.subr.mxu0 0.0
        %1260 = vmatpush2.msra.mxu0 0.0
        %1261 = vmatprep.subr.mxu0 0.0
        %1262 = vmatpush2.msra.mxu0 0.0
        %1263 = vmatprep.subr.mxu0 0.0
        %1264 = vmatpush2.msra.mxu0 0.0
        %1265 = vmatprep.subr.mxu0 0.0
        %1266 = vmatpush2.msra.mxu0 0.0
        %1267 = vmatprep.mubr.f32.mxu0 0.0
        %v1268 = vand.u32 %v939, 4294901760
        %v1269 = vsub.f32 %v939, %v1268
        %v1270 = vand.u32 %v1269, 4294901760
        %1271 = vmatmul.mubr.f32.gmra.mxu0 %v1270
        %v1272 = vpop.f32.mrf.mxu0
        %v1273 = vadd.f32 %v1191, %v1272
        %v1274 = vpop.f32.mrf.mxu0
        %1275 = vmatprep.mubr.f32.mxu0 0.0
        %v1276 = vand.u32 %v942, 4294901760
        %v1277 = vsub.f32 %v942, %v1276
        %v1278 = vand.u32 %v1277, 4294901760
        %1279 = vmatmul.mubr.f32.gmra.mxu0 %v1278
        %v1280 = vpop.f32.mrf.mxu0
        %v1281 = vadd.f32 %v1198, %v1280
        %v1282 = vpop.f32.mrf.mxu0
        %1283 = vdwg.mxu0
        %1284 = vmatprep.subr.mxu0 0.0
        %1285 = vmatpush1.msra.mxu0 0.0
        %1286 = vmatprep.subr.mxu0 0.0
        %1287 = vmatpush1.msra.mxu0 0.0
        %1288 = vmatprep.subr.mxu0 0.0
        %1289 = vmatpush1.msra.mxu0 0.0
        %1290 = vmatprep.subr.mxu0 0.0
        %1291 = vmatpush1.msra.mxu0 0.0
        %1292 = vmatprep.subr.mxu0 0.0
        %1293 = vmatpush1.msra.mxu0 0.0
        %1294 = vmatprep.subr.mxu0 0.0
        %1295 = vmatpush1.msra.mxu0 0.0
        %1296 = vmatprep.subr.mxu0 0.0
        %1297 = vmatpush1.msra.mxu0 0.0
        %1298 = vmatprep.subr.mxu0 0.0
        %1299 = vmatpush1.msra.mxu0 0.0
        %1300 = vmatprep.subr.mxu0 0.0
        %1301 = vmatpush1.msra.mxu0 0.0
        %1302 = vmatprep.subr.mxu0 0.0
        %1303 = vmatpush1.msra.mxu0 0.0
        %1304 = vmatprep.subr.mxu0 0.0
        %1305 = vmatpush1.msra.mxu0 0.0
        %1306 = vmatprep.subr.mxu0 0.0
        %1307 = vmatpush1.msra.mxu0 0.0
        %1308 = vmatprep.subr.mxu0 0.0
        %1309 = vmatpush1.msra.mxu0 0.0
        %1310 = vmatprep.subr.mxu0 0.0
        %1311 = vmatpush1.msra.mxu0 0.0
        %1312 = vmatprep.subr.mxu0 0.0
        %v1313 = vand.u32 %v416, 4294901760
        %v1314 = vsub.f32 %v416, %v1313
        %v1315 = vand.u32 %v1314, 4294901760
        %1316 = vmatpush1.msra.mxu0 %v1315
        %1317 = vmatprep.subr.mxu0 0.0
        %v1318 = vand.u32 %v415, 4294901760
        %v1319 = vsub.f32 %v415, %v1318
        %v1320 = vand.u32 %v1319, 4294901760
        %1321 = vmatpush1.msra.mxu0 %v1320
        %1322 = vmatprep.subr.mxu0 0.0
        %1323 = vmatpush2.msra.mxu0 0.0
        %1324 = vmatprep.subr.mxu0 0.0
        %1325 = vmatpush2.msra.mxu0 0.0
        %1326 = vmatprep.subr.mxu0 0.0
        %1327 = vmatpush2.msra.mxu0 0.0
        %1328 = vmatprep.subr.mxu0 0.0
        %1329 = vmatpush2.msra.mxu0 0.0
        %1330 = vmatprep.subr.mxu0 0.0
        %1331 = vmatpush2.msra.mxu0 0.0
        %1332 = vmatprep.subr.mxu0 0.0
        %1333 = vmatpush2.msra.mxu0 0.0
        %1334 = vmatprep.subr.mxu0 0.0
        %1335 = vmatpush2.msra.mxu0 0.0
        %1336 = vmatprep.subr.mxu0 0.0
        %1337 = vmatpush2.msra.mxu0 0.0
        %1338 = vmatprep.subr.mxu0 0.0
        %1339 = vmatpush2.msra.mxu0 0.0
        %1340 = vmatprep.subr.mxu0 0.0
        %1341 = vmatpush2.msra.mxu0 0.0
        %1342 = vmatprep.subr.mxu0 0.0
        %1343 = vmatpush2.msra.mxu0 0.0
        %1344 = vmatprep.subr.mxu0 0.0
        %1345 = vmatpush2.msra.mxu0 0.0
        %1346 = vmatprep.subr.mxu0 0.0
        %1347 = vmatpush2.msra.mxu0 0.0
        %1348 = vmatprep.subr.mxu0 0.0
        %1349 = vmatpush2.msra.mxu0 0.0
        %1350 = vmatprep.subr.mxu0 0.0
        %1351 = vmatpush2.msra.mxu0 0.0
        %1352 = vmatprep.subr.mxu0 0.0
        %1353 = vmatpush2.msra.mxu0 0.0
        %1354 = vmatprep.mubr.f32.mxu0 0.0
        %v1355 = vand.u32 %v939, 4294901760
        %1356 = vmatmul.mubr.f32.gmra.mxu0 %v1355
        %v1357 = vpop.f32.mrf.mxu0
        %v1358 = vadd.f32 %v1273, %v1357
        %v1359 = vpop.f32.mrf.mxu0
        %1360 = vmatprep.mubr.f32.mxu0 0.0
        %v1361 = vand.u32 %v942, 4294901760
        %1362 = vmatmul.mubr.f32.gmra.mxu0 %v1361
        %v1363 = vpop.f32.mrf.mxu0
        %v1364 = vadd.f32 %v1281, %v1363
        %v1365 = vpop.f32.mrf.mxu0
        %1366 = vdwg.mxu0
        %1367 = vmatprep.subr.mxu0 0.0
        %1368 = vmatpush1.msra.mxu0 0.0
        %1369 = vmatprep.subr.mxu0 0.0
        %1370 = vmatpush1.msra.mxu0 0.0
        %1371 = vmatprep.subr.mxu0 0.0
        %1372 = vmatpush1.msra.mxu0 0.0
        %1373 = vmatprep.subr.mxu0 0.0
        %1374 = vmatpush1.msra.mxu0 0.0
        %1375 = vmatprep.subr.mxu0 0.0
        %1376 = vmatpush1.msra.mxu0 0.0
        %1377 = vmatprep.subr.mxu0 0.0
        %1378 = vmatpush1.msra.mxu0 0.0
        %1379 = vmatprep.subr.mxu0 0.0
        %1380 = vmatpush1.msra.mxu0 0.0
        %1381 = vmatprep.subr.mxu0 0.0
        %1382 = vmatpush1.msra.mxu0 0.0
        %1383 = vmatprep.subr.mxu0 0.0
        %1384 = vmatpush1.msra.mxu0 0.0
        %1385 = vmatprep.subr.mxu0 0.0
        %1386 = vmatpush1.msra.mxu0 0.0
        %1387 = vmatprep.subr.mxu0 0.0
        %1388 = vmatpush1.msra.mxu0 0.0
        %1389 = vmatprep.subr.mxu0 0.0
        %1390 = vmatpush1.msra.mxu0 0.0
        %1391 = vmatprep.subr.mxu0 0.0
        %1392 = vmatpush1.msra.mxu0 0.0
        %1393 = vmatprep.subr.mxu0 0.0
        %1394 = vmatpush1.msra.mxu0 0.0
        %1395 = vmatprep.subr.mxu0 0.0
        %v1396 = vand.u32 %v416, 4294901760
        %1397 = vmatpush1.msra.mxu0 %v1396
        %1398 = vmatprep.subr.mxu0 0.0
        %v1399 = vand.u32 %v415, 4294901760
        %1400 = vmatpush1.msra.mxu0 %v1399
        %1401 = vmatprep.subr.mxu0 0.0
        %1402 = vmatpush2.msra.mxu0 0.0
        %1403 = vmatprep.subr.mxu0 0.0
        %1404 = vmatpush2.msra.mxu0 0.0
        %1405 = vmatprep.subr.mxu0 0.0
        %1406 = vmatpush2.msra.mxu0 0.0
        %1407 = vmatprep.subr.mxu0 0.0
        %1408 = vmatpush2.msra.mxu0 0.0
        %1409 = vmatprep.subr.mxu0 0.0
        %1410 = vmatpush2.msra.mxu0 0.0
        %1411 = vmatprep.subr.mxu0 0.0
        %1412 = vmatpush2.msra.mxu0 0.0
        %1413 = vmatprep.subr.mxu0 0.0
        %1414 = vmatpush2.msra.mxu0 0.0
        %1415 = vmatprep.subr.mxu0 0.0
        %1416 = vmatpush2.msra.mxu0 0.0
        %1417 = vmatprep.subr.mxu0 0.0
        %1418 = vmatpush2.msra.mxu0 0.0
        %1419 = vmatprep.subr.mxu0 0.0
        %1420 = vmatpush2.msra.mxu0 0.0
        %1421 = vmatprep.subr.mxu0 0.0
        %1422 = vmatpush2.msra.mxu0 0.0
        %1423 = vmatprep.subr.mxu0 0.0
        %1424 = vmatpush2.msra.mxu0 0.0
        %1425 = vmatprep.subr.mxu0 0.0
        %1426 = vmatpush2.msra.mxu0 0.0
        %1427 = vmatprep.subr.mxu0 0.0
        %1428 = vmatpush2.msra.mxu0 0.0
        %1429 = vmatprep.subr.mxu0 0.0
        %1430 = vmatpush2.msra.mxu0 0.0
        %1431 = vmatprep.subr.mxu0 0.0
        %1432 = vmatpush2.msra.mxu0 0.0
        %1433 = vmatprep.mubr.f32.mxu0 0.0
        %v1434 = vand.u32 %v939, 4294901760
        %1435 = vmatmul.mubr.f32.gmra.mxu0 %v1434
        %v1436 = vpop.f32.mrf.mxu0
        %v1437 = vadd.f32 %v1358, %v1436
        %v1438 = vpop.f32.mrf.mxu0
        %1439 = vmatprep.mubr.f32.mxu0 0.0
        %v1440 = vand.u32 %v942, 4294901760
        %1441 = vmatmul.mubr.f32.gmra.mxu0 %v1440
        %v1442 = vpop.f32.mrf.mxu0
        %v1443 = vadd.f32 %v1364, %v1442
        %v1444 = vpop.f32.mrf.mxu0
        %1445 = vdwg.mxu0
        %v1446 = vmul.f32 %v1437, %v421
        %v1447 = vmul.f32 %v1443, %v422
        %v1448 = vround.ne.pseudo %v1446
        %v1449 = vround.ne.pseudo %v1447
        %v1450 = vsub.f32 %v1446, %v1448
        %v1451 = vsub.f32 %v1447, %v1449
        %v1452 = vmul.f32 %v1450, %v1450
        %v1453 = vmul.f32 %v1451, %v1451
        %v1454 = vmul.f32 %v1450, %v1452
        %v1455 = vmul.f32 %v1451, %v1453
        %v1456 = vadd.f32 %v1448, %v1454
        %v1457 = vadd.f32 %v1449, %v1455
        %1458 = vst.msk [vmem:[%s408] sm:$0xff] %vm429, %v1456
        %1459 = vst.msk [vmem:[%s408 + $0x8] sm:$0xff] %vm429, %v1457
        %v1460 = vmul.f32 %v1456, %v419
        %v1461 = vmul.f32 %v1457, %v420
        %v1463 = vsel %vm429, %v413, 0
        %v1466 = vsel %vm429, %v414, 0
        %1468 = vmatprep.subr.mxu0 0.0
        %1469 = vmatpush1.msra.mxu0 0.0
        %1470 = vmatprep.subr.mxu0 0.0
        %1471 = vmatpush1.msra.mxu0 0.0
        %1472 = vmatprep.subr.mxu0 0.0
        %1473 = vmatpush1.msra.mxu0 0.0
        %1474 = vmatprep.subr.mxu0 0.0
        %1475 = vmatpush1.msra.mxu0 0.0
        %1476 = vmatprep.subr.mxu0 0.0
        %1477 = vmatpush1.msra.mxu0 0.0
        %1478 = vmatprep.subr.mxu0 0.0
        %1479 = vmatpush1.msra.mxu0 0.0
        %1480 = vmatprep.subr.mxu0 0.0
        %1481 = vmatpush1.msra.mxu0 0.0
        %1482 = vmatprep.subr.mxu0 0.0
        %1483 = vmatpush1.msra.mxu0 0.0
        %1484 = vmatprep.subr.mxu0 0.0
        %1485 = vmatpush1.msra.mxu0 0.0
        %1486 = vmatprep.subr.mxu0 0.0
        %1487 = vmatpush1.msra.mxu0 0.0
        %1488 = vmatprep.subr.mxu0 0.0
        %1489 = vmatpush1.msra.mxu0 0.0
        %1490 = vmatprep.subr.mxu0 0.0
        %1491 = vmatpush1.msra.mxu0 0.0
        %1492 = vmatprep.subr.mxu0 0.0
        %1493 = vmatpush1.msra.mxu0 0.0
        %1494 = vmatprep.subr.mxu0 0.0
        %1495 = vmatpush1.msra.mxu0 0.0
        %1496 = vmatprep.subr.mxu0 0.0
        %v1497 = vand.u32 %v1461, 4294901760
        %1498 = vmatpush1.msra.mxu0 %v1497
        %1499 = vmatprep.subr.mxu0 0.0
        %v1500 = vand.u32 %v1460, 4294901760
        %1501 = vmatpush1.msra.mxu0 %v1500
        %1502 = vmatprep.subr.mxu0 0.0
        %1503 = vmatpush2.msra.mxu0 0.0
        %1504 = vmatprep.subr.mxu0 0.0
        %1505 = vmatpush2.msra.mxu0 0.0
        %1506 = vmatprep.subr.mxu0 0.0
        %1507 = vmatpush2.msra.mxu0 0.0
        %1508 = vmatprep.subr.mxu0 0.0
        %1509 = vmatpush2.msra.mxu0 0.0
        %1510 = vmatprep.subr.mxu0 0.0
        %1511 = vmatpush2.msra.mxu0 0.0
        %1512 = vmatprep.subr.mxu0 0.0
        %1513 = vmatpush2.msra.mxu0 0.0
        %1514 = vmatprep.subr.mxu0 0.0
        %1515 = vmatpush2.msra.mxu0 0.0
        %1516 = vmatprep.subr.mxu0 0.0
        %1517 = vmatpush2.msra.mxu0 0.0
        %1518 = vmatprep.subr.mxu0 0.0
        %1519 = vmatpush2.msra.mxu0 0.0
        %1520 = vmatprep.subr.mxu0 0.0
        %1521 = vmatpush2.msra.mxu0 0.0
        %1522 = vmatprep.subr.mxu0 0.0
        %1523 = vmatpush2.msra.mxu0 0.0
        %1524 = vmatprep.subr.mxu0 0.0
        %1525 = vmatpush2.msra.mxu0 0.0
        %1526 = vmatprep.subr.mxu0 0.0
        %1527 = vmatpush2.msra.mxu0 0.0
        %1528 = vmatprep.subr.mxu0 0.0
        %1529 = vmatpush2.msra.mxu0 0.0
        %1530 = vmatprep.subr.mxu0 0.0
        %1531 = vmatpush2.msra.mxu0 0.0
        %1532 = vmatprep.subr.mxu0 0.0
        %1533 = vmatpush2.msra.mxu0 0.0
        %1534 = vmatprep.mubr.f32.mxu0 0.0
        %v1535 = vand.u32 %v1463, 4294901760
        %v1536 = vsub.f32 %v1463, %v1535
        %v1537 = vand.u32 %v1536, 4294901760
        %v1538 = vsub.f32 %v1536, %v1537
        %v1539 = vand.u32 %v1538, 4294901760
        %1540 = vmatmul.mubr.f32.gmra.mxu0 %v1539
        %v1541 = vpop.f32.mrf.mxu0
        %v1542 = vadd.f32 0.0, %v1541
        %v1543 = vpop.f32.mrf.mxu0
        %1544 = vmatprep.mubr.f32.mxu0 0.0
        %v1545 = vand.u32 %v1466, 4294901760
        %v1546 = vsub.f32 %v1466, %v1545
        %v1547 = vand.u32 %v1546, 4294901760
        %v1548 = vsub.f32 %v1546, %v1547
        %v1549 = vand.u32 %v1548, 4294901760
        %1550 = vmatmul.mubr.f32.gmra.mxu0 %v1549
        %v1551 = vpop.f32.mrf.mxu0
        %v1552 = vadd.f32 0.0, %v1551
        %v1553 = vpop.f32.mrf.mxu0
        %1554 = vdwg.mxu0
        %1555 = vmatprep.subr.mxu0 0.0
        %1556 = vmatpush1.msra.mxu0 0.0
        %1557 = vmatprep.subr.mxu0 0.0
        %1558 = vmatpush1.msra.mxu0 0.0
        %1559 = vmatprep.subr.mxu0 0.0
        %1560 = vmatpush1.msra.mxu0 0.0
        %1561 = vmatprep.subr.mxu0 0.0
        %1562 = vmatpush1.msra.mxu0 0.0
        %1563 = vmatprep.subr.mxu0 0.0
        %1564 = vmatpush1.msra.mxu0 0.0
        %1565 = vmatprep.subr.mxu0 0.0
        %1566 = vmatpush1.msra.mxu0 0.0
        %1567 = vmatprep.subr.mxu0 0.0
        %1568 = vmatpush1.msra.mxu0 0.0
        %1569 = vmatprep.subr.mxu0 0.0
        %1570 = vmatpush1.msra.mxu0 0.0
        %1571 = vmatprep.subr.mxu0 0.0
        %1572 = vmatpush1.msra.mxu0 0.0
        %1573 = vmatprep.subr.mxu0 0.0
        %1574 = vmatpush1.msra.mxu0 0.0
        %1575 = vmatprep.subr.mxu0 0.0
        %1576 = vmatpush1.msra.mxu0 0.0
        %1577 = vmatprep.subr.mxu0 0.0
        %1578 = vmatpush1.msra.mxu0 0.0
        %1579 = vmatprep.subr.mxu0 0.0
        %1580 = vmatpush1.msra.mxu0 0.0
        %1581 = vmatprep.subr.mxu0 0.0
        %1582 = vmatpush1.msra.mxu0 0.0
        %1583 = vmatprep.subr.mxu0 0.0
        %v1584 = vand.u32 %v1461, 4294901760
        %v1585 = vsub.f32 %v1461, %v1584
        %v1586 = vand.u32 %v1585, 4294901760
        %v1587 = vsub.f32 %v1585, %v1586
        %v1588 = vand.u32 %v1587, 4294901760
        %1589 = vmatpush1.msra.mxu0 %v1588
        %1590 = vmatprep.subr.mxu0 0.0
        %v1591 = vand.u32 %v1460, 4294901760
        %v1592 = vsub.f32 %v1460, %v1591
        %v1593 = vand.u32 %v1592, 4294901760
        %v1594 = vsub.f32 %v1592, %v1593
        %v1595 = vand.u32 %v1594, 4294901760
        %1596 = vmatpush1.msra.mxu0 %v1595
        %1597 = vmatprep.subr.mxu0 0.0
        %1598 = vmatpush2.msra.mxu0 0.0
        %1599 = vmatprep.subr.mxu0 0.0
        %1600 = vmatpush2.msra.mxu0 0.0
        %1601 = vmatprep.subr.mxu0 0.0
        %1602 = vmatpush2.msra.mxu0 0.0
        %1603 = vmatprep.subr.mxu0 0.0
        %1604 = vmatpush2.msra.mxu0 0.0
        %1605 = vmatprep.subr.mxu0 0.0
        %1606 = vmatpush2.msra.mxu0 0.0
        %1607 = vmatprep.subr.mxu0 0.0
        %1608 = vmatpush2.msra.mxu0 0.0
        %1609 = vmatprep.subr.mxu0 0.0
        %1610 = vmatpush2.msra.mxu0 0.0
        %1611 = vmatprep.subr.mxu0 0.0
        %1612 = vmatpush2.msra.mxu0 0.0
        %1613 = vmatprep.subr.mxu0 0.0
        %1614 = vmatpush2.msra.mxu0 0.0
        %1615 = vmatprep.subr.mxu0 0.0
        %1616 = vmatpush2.msra.mxu0 0.0
        %1617 = vmatprep.subr.mxu0 0.0
        %1618 = vmatpush2.msra.mxu0 0.0
        %1619 = vmatprep.subr.mxu0 0.0
        %1620 = vmatpush2.msra.mxu0 0.0
        %1621 = vmatprep.subr.mxu0 0.0
        %1622 = vmatpush2.msra.mxu0 0.0
        %1623 = vmatprep.subr.mxu0 0.0
        %1624 = vmatpush2.msra.mxu0 0.0
        %1625 = vmatprep.subr.mxu0 0.0
        %1626 = vmatpush2.msra.mxu0 0.0
        %1627 = vmatprep.subr.mxu0 0.0
        %1628 = vmatpush2.msra.mxu0 0.0
        %1629 = vmatprep.mubr.f32.mxu0 0.0
        %v1630 = vand.u32 %v1463, 4294901760
        %1631 = vmatmul.mubr.f32.gmra.mxu0 %v1630
        %v1632 = vpop.f32.mrf.mxu0
        %v1633 = vadd.f32 %v1542, %v1632
        %v1634 = vpop.f32.mrf.mxu0
        %1635 = vmatprep.mubr.f32.mxu0 0.0
        %v1636 = vand.u32 %v1466, 4294901760
        %1637 = vmatmul.mubr.f32.gmra.mxu0 %v1636
        %v1638 = vpop.f32.mrf.mxu0
        %v1639 = vadd.f32 %v1552, %v1638
        %v1640 = vpop.f32.mrf.mxu0
        %1641 = vdwg.mxu0
        %1642 = vmatprep.subr.mxu0 0.0
        %1643 = vmatpush1.msra.mxu0 0.0
        %1644 = vmatprep.subr.mxu0 0.0
        %1645 = vmatpush1.msra.mxu0 0.0
        %1646 = vmatprep.subr.mxu0 0.0
        %1647 = vmatpush1.msra.mxu0 0.0
        %1648 = vmatprep.subr.mxu0 0.0
        %1649 = vmatpush1.msra.mxu0 0.0
        %1650 = vmatprep.subr.mxu0 0.0
        %1651 = vmatpush1.msra.mxu0 0.0
        %1652 = vmatprep.subr.mxu0 0.0
        %1653 = vmatpush1.msra.mxu0 0.0
        %1654 = vmatprep.subr.mxu0 0.0
        %1655 = vmatpush1.msra.mxu0 0.0
        %1656 = vmatprep.subr.mxu0 0.0
        %1657 = vmatpush1.msra.mxu0 0.0
        %1658 = vmatprep.subr.mxu0 0.0
        %1659 = vmatpush1.msra.mxu0 0.0
        %1660 = vmatprep.subr.mxu0 0.0
        %1661 = vmatpush1.msra.mxu0 0.0
        %1662 = vmatprep.subr.mxu0 0.0
        %1663 = vmatpush1.msra.mxu0 0.0
        %1664 = vmatprep.subr.mxu0 0.0
        %1665 = vmatpush1.msra.mxu0 0.0
        %1666 = vmatprep.subr.mxu0 0.0
        %1667 = vmatpush1.msra.mxu0 0.0
        %1668 = vmatprep.subr.mxu0 0.0
        %1669 = vmatpush1.msra.mxu0 0.0
        %1670 = vmatprep.subr.mxu0 0.0
        %v1671 = vand.u32 %v1461, 4294901760
        %v1672 = vsub.f32 %v1461, %v1671
        %1673 = vmatpush1.msra.mxu0 %v1672
        %1674 = vmatprep.subr.mxu0 0.0
        %v1675 = vand.u32 %v1460, 4294901760
        %v1676 = vsub.f32 %v1460, %v1675
        %1677 = vmatpush1.msra.mxu0 %v1676
        %1678 = vmatprep.subr.mxu0 0.0
        %1679 = vmatpush2.msra.mxu0 0.0
        %1680 = vmatprep.subr.mxu0 0.0
        %1681 = vmatpush2.msra.mxu0 0.0
        %1682 = vmatprep.subr.mxu0 0.0
        %1683 = vmatpush2.msra.mxu0 0.0
        %1684 = vmatprep.subr.mxu0 0.0
        %1685 = vmatpush2.msra.mxu0 0.0
        %1686 = vmatprep.subr.mxu0 0.0
        %1687 = vmatpush2.msra.mxu0 0.0
        %1688 = vmatprep.subr.mxu0 0.0
        %1689 = vmatpush2.msra.mxu0 0.0
        %1690 = vmatprep.subr.mxu0 0.0
        %1691 = vmatpush2.msra.mxu0 0.0
        %1692 = vmatprep.subr.mxu0 0.0
        %1693 = vmatpush2.msra.mxu0 0.0
        %1694 = vmatprep.subr.mxu0 0.0
        %1695 = vmatpush2.msra.mxu0 0.0
        %1696 = vmatprep.subr.mxu0 0.0
        %1697 = vmatpush2.msra.mxu0 0.0
        %1698 = vmatprep.subr.mxu0 0.0
        %1699 = vmatpush2.msra.mxu0 0.0
        %1700 = vmatprep.subr.mxu0 0.0
        %1701 = vmatpush2.msra.mxu0 0.0
        %1702 = vmatprep.subr.mxu0 0.0
        %1703 = vmatpush2.msra.mxu0 0.0
        %1704 = vmatprep.subr.mxu0 0.0
        %1705 = vmatpush2.msra.mxu0 0.0
        %1706 = vmatprep.subr.mxu0 0.0
        %1707 = vmatpush2.msra.mxu0 0.0
        %1708 = vmatprep.subr.mxu0 0.0
        %1709 = vmatpush2.msra.mxu0 0.0
        %1710 = vmatprep.mubr.f32.mxu0 0.0
        %v1711 = vand.u32 %v1463, 4294901760
        %v1712 = vsub.f32 %v1463, %v1711
        %1713 = vmatmul.mubr.f32.gmra.mxu0 %v1712
        %v1714 = vpop.f32.mrf.mxu0
        %v1715 = vadd.f32 %v1633, %v1714
        %v1716 = vpop.f32.mrf.mxu0
        %1717 = vmatprep.mubr.f32.mxu0 0.0
        %v1718 = vand.u32 %v1466, 4294901760
        %v1719 = vsub.f32 %v1466, %v1718
        %1720 = vmatmul.mubr.f32.gmra.mxu0 %v1719
        %v1721 = vpop.f32.mrf.mxu0
        %v1722 = vadd.f32 %v1639, %v1721
        %v1723 = vpop.f32.mrf.mxu0
        %1724 = vdwg.mxu0
        %1725 = vmatprep.subr.mxu0 0.0
        %1726 = vmatpush1.msra.mxu0 0.0
        %1727 = vmatprep.subr.mxu0 0.0
        %1728 = vmatpush1.msra.mxu0 0.0
        %1729 = vmatprep.subr.mxu0 0.0
        %1730 = vmatpush1.msra.mxu0 0.0
        %1731 = vmatprep.subr.mxu0 0.0
        %1732 = vmatpush1.msra.mxu0 0.0
        %1733 = vmatprep.subr.mxu0 0.0
        %1734 = vmatpush1.msra.mxu0 0.0
        %1735 = vmatprep.subr.mxu0 0.0
        %1736 = vmatpush1.msra.mxu0 0.0
        %1737 = vmatprep.subr.mxu0 0.0
        %1738 = vmatpush1.msra.mxu0 0.0
        %1739 = vmatprep.subr.mxu0 0.0
        %1740 = vmatpush1.msra.mxu0 0.0
        %1741 = vmatprep.subr.mxu0 0.0
        %1742 = vmatpush1.msra.mxu0 0.0
        %1743 = vmatprep.subr.mxu0 0.0
        %1744 = vmatpush1.msra.mxu0 0.0
        %1745 = vmatprep.subr.mxu0 0.0
        %1746 = vmatpush1.msra.mxu0 0.0
        %1747 = vmatprep.subr.mxu0 0.0
        %1748 = vmatpush1.msra.mxu0 0.0
        %1749 = vmatprep.subr.mxu0 0.0
        %1750 = vmatpush1.msra.mxu0 0.0
        %1751 = vmatprep.subr.mxu0 0.0
        %1752 = vmatpush1.msra.mxu0 0.0
        %1753 = vmatprep.subr.mxu0 0.0
        %v1754 = vand.u32 %v1461, 4294901760
        %1755 = vmatpush1.msra.mxu0 %v1754
        %1756 = vmatprep.subr.mxu0 0.0
        %v1757 = vand.u32 %v1460, 4294901760
        %1758 = vmatpush1.msra.mxu0 %v1757
        %1759 = vmatprep.subr.mxu0 0.0
        %1760 = vmatpush2.msra.mxu0 0.0
        %1761 = vmatprep.subr.mxu0 0.0
        %1762 = vmatpush2.msra.mxu0 0.0
        %1763 = vmatprep.subr.mxu0 0.0
        %1764 = vmatpush2.msra.mxu0 0.0
        %1765 = vmatprep.subr.mxu0 0.0
        %1766 = vmatpush2.msra.mxu0 0.0
        %1767 = vmatprep.subr.mxu0 0.0
        %1768 = vmatpush2.msra.mxu0 0.0
        %1769 = vmatprep.subr.mxu0 0.0
        %1770 = vmatpush2.msra.mxu0 0.0
        %1771 = vmatprep.subr.mxu0 0.0
        %1772 = vmatpush2.msra.mxu0 0.0
        %1773 = vmatprep.subr.mxu0 0.0
        %1774 = vmatpush2.msra.mxu0 0.0
        %1775 = vmatprep.subr.mxu0 0.0
        %1776 = vmatpush2.msra.mxu0 0.0
        %1777 = vmatprep.subr.mxu0 0.0
        %1778 = vmatpush2.msra.mxu0 0.0
        %1779 = vmatprep.subr.mxu0 0.0
        %1780 = vmatpush2.msra.mxu0 0.0
        %1781 = vmatprep.subr.mxu0 0.0
        %1782 = vmatpush2.msra.mxu0 0.0
        %1783 = vmatprep.subr.mxu0 0.0
        %1784 = vmatpush2.msra.mxu0 0.0
        %1785 = vmatprep.subr.mxu0 0.0
        %1786 = vmatpush2.msra.mxu0 0.0
        %1787 = vmatprep.subr.mxu0 0.0
        %1788 = vmatpush2.msra.mxu0 0.0
        %1789 = vmatprep.subr.mxu0 0.0
        %1790 = vmatpush2.msra.mxu0 0.0
        %1791 = vmatprep.mubr.f32.mxu0 0.0
        %v1792 = vand.u32 %v1463, 4294901760
        %v1793 = vsub.f32 %v1463, %v1792
        %v1794 = vand.u32 %v1793, 4294901760
        %1795 = vmatmul.mubr.f32.gmra.mxu0 %v1794
        %v1796 = vpop.f32.mrf.mxu0
        %v1797 = vadd.f32 %v1715, %v1796
        %v1798 = vpop.f32.mrf.mxu0
        %1799 = vmatprep.mubr.f32.mxu0 0.0
        %v1800 = vand.u32 %v1466, 4294901760
        %v1801 = vsub.f32 %v1466, %v1800
        %v1802 = vand.u32 %v1801, 4294901760
        %1803 = vmatmul.mubr.f32.gmra.mxu0 %v1802
        %v1804 = vpop.f32.mrf.mxu0
        %v1805 = vadd.f32 %v1722, %v1804
        %v1806 = vpop.f32.mrf.mxu0
        %1807 = vdwg.mxu0
        %1808 = vmatprep.subr.mxu0 0.0
        %1809 = vmatpush1.msra.mxu0 0.0
        %1810 = vmatprep.subr.mxu0 0.0
        %1811 = vmatpush1.msra.mxu0 0.0
        %1812 = vmatprep.subr.mxu0 0.0
        %1813 = vmatpush1.msra.mxu0 0.0
        %1814 = vmatprep.subr.mxu0 0.0
        %1815 = vmatpush1.msra.mxu0 0.0
        %1816 = vmatprep.subr.mxu0 0.0
        %1817 = vmatpush1.msra.mxu0 0.0
        %1818 = vmatprep.subr.mxu0 0.0
        %1819 = vmatpush1.msra.mxu0 0.0
        %1820 = vmatprep.subr.mxu0 0.0
        %1821 = vmatpush1.msra.mxu0 0.0
        %1822 = vmatprep.subr.mxu0 0.0
        %1823 = vmatpush1.msra.mxu0 0.0
        %1824 = vmatprep.subr.mxu0 0.0
        %1825 = vmatpush1.msra.mxu0 0.0
        %1826 = vmatprep.subr.mxu0 0.0
        %1827 = vmatpush1.msra.mxu0 0.0
        %1828 = vmatprep.subr.mxu0 0.0
        %1829 = vmatpush1.msra.mxu0 0.0
        %1830 = vmatprep.subr.mxu0 0.0
        %1831 = vmatpush1.msra.mxu0 0.0
        %1832 = vmatprep.subr.mxu0 0.0
        %1833 = vmatpush1.msra.mxu0 0.0
        %1834 = vmatprep.subr.mxu0 0.0
        %1835 = vmatpush1.msra.mxu0 0.0
        %1836 = vmatprep.subr.mxu0 0.0
        %v1837 = vand.u32 %v1461, 4294901760
        %v1838 = vsub.f32 %v1461, %v1837
        %v1839 = vand.u32 %v1838, 4294901760
        %1840 = vmatpush1.msra.mxu0 %v1839
        %1841 = vmatprep.subr.mxu0 0.0
        %v1842 = vand.u32 %v1460, 4294901760
        %v1843 = vsub.f32 %v1460, %v1842
        %v1844 = vand.u32 %v1843, 4294901760
        %1845 = vmatpush1.msra.mxu0 %v1844
        %1846 = vmatprep.subr.mxu0 0.0
        %1847 = vmatpush2.msra.mxu0 0.0
        %1848 = vmatprep.subr.mxu0 0.0
        %1849 = vmatpush2.msra.mxu0 0.0
        %1850 = vmatprep.subr.mxu0 0.0
        %1851 = vmatpush2.msra.mxu0 0.0
        %1852 = vmatprep.subr.mxu0 0.0
        %1853 = vmatpush2.msra.mxu0 0.0
        %1854 = vmatprep.subr.mxu0 0.0
        %1855 = vmatpush2.msra.mxu0 0.0
        %1856 = vmatprep.subr.mxu0 0.0
        %1857 = vmatpush2.msra.mxu0 0.0
        %1858 = vmatprep.subr.mxu0 0.0
        %1859 = vmatpush2.msra.mxu0 0.0
        %1860 = vmatprep.subr.mxu0 0.0
        %1861 = vmatpush2.msra.mxu0 0.0
        %1862 = vmatprep.subr.mxu0 0.0
        %1863 = vmatpush2.msra.mxu0 0.0
        %1864 = vmatprep.subr.mxu0 0.0
        %1865 = vmatpush2.msra.mxu0 0.0
        %1866 = vmatprep.subr.mxu0 0.0
        %1867 = vmatpush2.msra.mxu0 0.0
        %1868 = vmatprep.subr.mxu0 0.0
        %1869 = vmatpush2.msra.mxu0 0.0
        %1870 = vmatprep.subr.mxu0 0.0
        %1871 = vmatpush2.msra.mxu0 0.0
        %1872 = vmatprep.subr.mxu0 0.0
        %1873 = vmatpush2.msra.mxu0 0.0
        %1874 = vmatprep.subr.mxu0 0.0
        %1875 = vmatpush2.msra.mxu0 0.0
        %1876 = vmatprep.subr.mxu0 0.0
        %1877 = vmatpush2.msra.mxu0 0.0
        %1878 = vmatprep.mubr.f32.mxu0 0.0
        %v1879 = vand.u32 %v1463, 4294901760
        %1880 = vmatmul.mubr.f32.gmra.mxu0 %v1879
        %v1881 = vpop.f32.mrf.mxu0
        %v1882 = vadd.f32 %v1797, %v1881
        %v1883 = vpop.f32.mrf.mxu0
        %1884 = vmatprep.mubr.f32.mxu0 0.0
        %v1885 = vand.u32 %v1466, 4294901760
        %1886 = vmatmul.mubr.f32.gmra.mxu0 %v1885
        %v1887 = vpop.f32.mrf.mxu0
        %v1888 = vadd.f32 %v1805, %v1887
        %v1889 = vpop.f32.mrf.mxu0
        %1890 = vdwg.mxu0
        %1891 = vmatprep.subr.mxu0 0.0
        %1892 = vmatpush1.msra.mxu0 0.0
        %1893 = vmatprep.subr.mxu0 0.0
        %1894 = vmatpush1.msra.mxu0 0.0
        %1895 = vmatprep.subr.mxu0 0.0
        %1896 = vmatpush1.msra.mxu0 0.0
        %1897 = vmatprep.subr.mxu0 0.0
        %1898 = vmatpush1.msra.mxu0 0.0
        %1899 = vmatprep.subr.mxu0 0.0
        %1900 = vmatpush1.msra.mxu0 0.0
        %1901 = vmatprep.subr.mxu0 0.0
        %1902 = vmatpush1.msra.mxu0 0.0
        %1903 = vmatprep.subr.mxu0 0.0
        %1904 = vmatpush1.msra.mxu0 0.0
        %1905 = vmatprep.subr.mxu0 0.0
        %1906 = vmatpush1.msra.mxu0 0.0
        %1907 = vmatprep.subr.mxu0 0.0
        %1908 = vmatpush1.msra.mxu0 0.0
        %1909 = vmatprep.subr.mxu0 0.0
        %1910 = vmatpush1.msra.mxu0 0.0
        %1911 = vmatprep.subr.mxu0 0.0
        %1912 = vmatpush1.msra.mxu0 0.0
        %1913 = vmatprep.subr.mxu0 0.0
        %1914 = vmatpush1.msra.mxu0 0.0
        %1915 = vmatprep.subr.mxu0 0.0
        %1916 = vmatpush1.msra.mxu0 0.0
        %1917 = vmatprep.subr.mxu0 0.0
        %1918 = vmatpush1.msra.mxu0 0.0
        %1919 = vmatprep.subr.mxu0 0.0
        %v1920 = vand.u32 %v1461, 4294901760
        %1921 = vmatpush1.msra.mxu0 %v1920
        %1922 = vmatprep.subr.mxu0 0.0
        %v1923 = vand.u32 %v1460, 4294901760
        %1924 = vmatpush1.msra.mxu0 %v1923
        %1925 = vmatprep.subr.mxu0 0.0
        %1926 = vmatpush2.msra.mxu0 0.0
        %1927 = vmatprep.subr.mxu0 0.0
        %1928 = vmatpush2.msra.mxu0 0.0
        %1929 = vmatprep.subr.mxu0 0.0
        %1930 = vmatpush2.msra.mxu0 0.0
        %1931 = vmatprep.subr.mxu0 0.0
        %1932 = vmatpush2.msra.mxu0 0.0
        %1933 = vmatprep.subr.mxu0 0.0
        %1934 = vmatpush2.msra.mxu0 0.0
        %1935 = vmatprep.subr.mxu0 0.0
        %1936 = vmatpush2.msra.mxu0 0.0
        %1937 = vmatprep.subr.mxu0 0.0
        %1938 = vmatpush2.msra.mxu0 0.0
        %1939 = vmatprep.subr.mxu0 0.0
        %1940 = vmatpush2.msra.mxu0 0.0
        %1941 = vmatprep.subr.mxu0 0.0
        %1942 = vmatpush2.msra.mxu0 0.0
        %1943 = vmatprep.subr.mxu0 0.0
        %1944 = vmatpush2.msra.mxu0 0.0
        %1945 = vmatprep.subr.mxu0 0.0
        %1946 = vmatpush2.msra.mxu0 0.0
        %1947 = vmatprep.subr.mxu0 0.0
        %1948 = vmatpush2.msra.mxu0 0.0
        %1949 = vmatprep.subr.mxu0 0.0
        %1950 = vmatpush2.msra.mxu0 0.0
        %1951 = vmatprep.subr.mxu0 0.0
        %1952 = vmatpush2.msra.mxu0 0.0
        %1953 = vmatprep.subr.mxu0 0.0
        %1954 = vmatpush2.msra.mxu0 0.0
        %1955 = vmatprep.subr.mxu0 0.0
        %1956 = vmatpush2.msra.mxu0 0.0
        %1957 = vmatprep.mubr.f32.mxu0 0.0
        %v1958 = vand.u32 %v1463, 4294901760
        %1959 = vmatmul.mubr.f32.gmra.mxu0 %v1958
        %v1960 = vpop.f32.mrf.mxu0
        %v1961 = vadd.f32 %v1882, %v1960
        %v1962 = vpop.f32.mrf.mxu0
        %1963 = vmatprep.mubr.f32.mxu0 0.0
        %v1964 = vand.u32 %v1466, 4294901760
        %1965 = vmatmul.mubr.f32.gmra.mxu0 %v1964
        %v1966 = vpop.f32.mrf.mxu0
        %v1967 = vadd.f32 %v1888, %v1966
        %v1968 = vpop.f32.mrf.mxu0
        %1969 = vdwg.mxu0
        %v1971 = vsel %vm429, %v1961, 0
        %v1974 = vsel %vm429, %v1967, 0
        %1976 = vmatprep.subr.mxu0 0.0
        %1977 = vmatpush1.msra.mxu0 0.0
        %1978 = vmatprep.subr.mxu0 0.0
        %1979 = vmatpush1.msra.mxu0 0.0
        %1980 = vmatprep.subr.mxu0 0.0
        %1981 = vmatpush1.msra.mxu0 0.0
        %1982 = vmatprep.subr.mxu0 0.0
        %1983 = vmatpush1.msra.mxu0 0.0
        %1984 = vmatprep.subr.mxu0 0.0
        %1985 = vmatpush1.msra.mxu0 0.0
        %1986 = vmatprep.subr.mxu0 0.0
        %1987 = vmatpush1.msra.mxu0 0.0
        %1988 = vmatprep.subr.mxu0 0.0
        %1989 = vmatpush1.msra.mxu0 0.0
        %1990 = vmatprep.subr.mxu0 0.0
        %1991 = vmatpush1.msra.mxu0 0.0
        %1992 = vmatprep.subr.mxu0 0.0
        %1993 = vmatpush1.msra.mxu0 0.0
        %1994 = vmatprep.subr.mxu0 0.0
        %1995 = vmatpush1.msra.mxu0 0.0
        %1996 = vmatprep.subr.mxu0 0.0
        %1997 = vmatpush1.msra.mxu0 0.0
        %1998 = vmatprep.subr.mxu0 0.0
        %1999 = vmatpush1.msra.mxu0 0.0
        %2000 = vmatprep.subr.mxu0 0.0
        %2001 = vmatpush1.msra.mxu0 0.0
        %2002 = vmatprep.subr.mxu0 0.0
        %2003 = vmatpush1.msra.mxu0 0.0
        %2004 = vmatprep.subr.mxu0 0.0
        %v2005 = vand.u32 %v418, 4294901760
        %2006 = vmatpush1.msra.mxu0 %v2005
        %2007 = vmatprep.subr.mxu0 0.0
        %v2008 = vand.u32 %v417, 4294901760
        %2009 = vmatpush1.msra.mxu0 %v2008
        %2010 = vmatprep.subr.mxu0 0.0
        %2011 = vmatpush2.msra.mxu0 0.0
        %2012 = vmatprep.subr.mxu0 0.0
        %2013 = vmatpush2.msra.mxu0 0.0
        %2014 = vmatprep.subr.mxu0 0.0
        %2015 = vmatpush2.msra.mxu0 0.0
        %2016 = vmatprep.subr.mxu0 0.0
        %2017 = vmatpush2.msra.mxu0 0.0
        %2018 = vmatprep.subr.mxu0 0.0
        %2019 = vmatpush2.msra.mxu0 0.0
        %2020 = vmatprep.subr.mxu0 0.0
        %2021 = vmatpush2.msra.mxu0 0.0
        %2022 = vmatprep.subr.mxu0 0.0
        %2023 = vmatpush2.msra.mxu0 0.0
        %2024 = vmatprep.subr.mxu0 0.0
        %2025 = vmatpush2.msra.mxu0 0.0
        %2026 = vmatprep.subr.mxu0 0.0
        %2027 = vmatpush2.msra.mxu0 0.0
        %2028 = vmatprep.subr.mxu0 0.0
        %2029 = vmatpush2.msra.mxu0 0.0
        %2030 = vmatprep.subr.mxu0 0.0
        %2031 = vmatpush2.msra.mxu0 0.0
        %2032 = vmatprep.subr.mxu0 0.0
        %2033 = vmatpush2.msra.mxu0 0.0
        %2034 = vmatprep.subr.mxu0 0.0
        %2035 = vmatpush2.msra.mxu0 0.0
        %2036 = vmatprep.subr.mxu0 0.0
        %2037 = vmatpush2.msra.mxu0 0.0
        %2038 = vmatprep.subr.mxu0 0.0
        %2039 = vmatpush2.msra.mxu0 0.0
        %2040 = vmatprep.subr.mxu0 0.0
        %2041 = vmatpush2.msra.mxu0 0.0
        %2042 = vmatprep.mubr.f32.mxu0 0.0
        %v2043 = vand.u32 %v1971, 4294901760
        %v2044 = vsub.f32 %v1971, %v2043
        %v2045 = vand.u32 %v2044, 4294901760
        %v2046 = vsub.f32 %v2044, %v2045
        %v2047 = vand.u32 %v2046, 4294901760
        %2048 = vmatmul.mubr.f32.gmra.mxu0 %v2047
        %v2049 = vpop.f32.mrf.mxu0
        %v2050 = vadd.f32 128.0, %v2049
        %v2051 = vpop.f32.mrf.mxu0
        %2052 = vmatprep.mubr.f32.mxu0 0.0
        %v2053 = vand.u32 %v1974, 4294901760
        %v2054 = vsub.f32 %v1974, %v2053
        %v2055 = vand.u32 %v2054, 4294901760
        %v2056 = vsub.f32 %v2054, %v2055
        %v2057 = vand.u32 %v2056, 4294901760
        %2058 = vmatmul.mubr.f32.gmra.mxu0 %v2057
        %v2059 = vpop.f32.mrf.mxu0
        %v2060 = vadd.f32 128.0, %v2059
        %v2061 = vpop.f32.mrf.mxu0
        %2062 = vdwg.mxu0
        %2063 = vmatprep.subr.mxu0 0.0
        %2064 = vmatpush1.msra.mxu0 0.0
        %2065 = vmatprep.subr.mxu0 0.0
        %2066 = vmatpush1.msra.mxu0 0.0
        %2067 = vmatprep.subr.mxu0 0.0
        %2068 = vmatpush1.msra.mxu0 0.0
        %2069 = vmatprep.subr.mxu0 0.0
        %2070 = vmatpush1.msra.mxu0 0.0
        %2071 = vmatprep.subr.mxu0 0.0
        %2072 = vmatpush1.msra.mxu0 0.0
        %2073 = vmatprep.subr.mxu0 0.0
        %2074 = vmatpush1.msra.mxu0 0.0
        %2075 = vmatprep.subr.mxu0 0.0
        %2076 = vmatpush1.msra.mxu0 0.0
        %2077 = vmatprep.subr.mxu0 0.0
        %2078 = vmatpush1.msra.mxu0 0.0
        %2079 = vmatprep.subr.mxu0 0.0
        %2080 = vmatpush1.msra.mxu0 0.0
        %2081 = vmatprep.subr.mxu0 0.0
        %2082 = vmatpush1.msra.mxu0 0.0
        %2083 = vmatprep.subr.mxu0 0.0
        %2084 = vmatpush1.msra.mxu0 0.0
        %2085 = vmatprep.subr.mxu0 0.0
        %2086 = vmatpush1.msra.mxu0 0.0
        %2087 = vmatprep.subr.mxu0 0.0
        %2088 = vmatpush1.msra.mxu0 0.0
        %2089 = vmatprep.subr.mxu0 0.0
        %2090 = vmatpush1.msra.mxu0 0.0
        %2091 = vmatprep.subr.mxu0 0.0
        %v2092 = vand.u32 %v418, 4294901760
        %v2093 = vsub.f32 %v418, %v2092
        %v2094 = vand.u32 %v2093, 4294901760
        %v2095 = vsub.f32 %v2093, %v2094
        %v2096 = vand.u32 %v2095, 4294901760
        %2097 = vmatpush1.msra.mxu0 %v2096
        %2098 = vmatprep.subr.mxu0 0.0
        %v2099 = vand.u32 %v417, 4294901760
        %v2100 = vsub.f32 %v417, %v2099
        %v2101 = vand.u32 %v2100, 4294901760
        %v2102 = vsub.f32 %v2100, %v2101
        %v2103 = vand.u32 %v2102, 4294901760
        %2104 = vmatpush1.msra.mxu0 %v2103
        %2105 = vmatprep.subr.mxu0 0.0
        %2106 = vmatpush2.msra.mxu0 0.0
        %2107 = vmatprep.subr.mxu0 0.0
        %2108 = vmatpush2.msra.mxu0 0.0
        %2109 = vmatprep.subr.mxu0 0.0
        %2110 = vmatpush2.msra.mxu0 0.0
        %2111 = vmatprep.subr.mxu0 0.0
        %2112 = vmatpush2.msra.mxu0 0.0
        %2113 = vmatprep.subr.mxu0 0.0
        %2114 = vmatpush2.msra.mxu0 0.0
        %2115 = vmatprep.subr.mxu0 0.0
        %2116 = vmatpush2.msra.mxu0 0.0
        %2117 = vmatprep.subr.mxu0 0.0
        %2118 = vmatpush2.msra.mxu0 0.0
        %2119 = vmatprep.subr.mxu0 0.0
        %2120 = vmatpush2.msra.mxu0 0.0
        %2121 = vmatprep.subr.mxu0 0.0
        %2122 = vmatpush2.msra.mxu0 0.0
        %2123 = vmatprep.subr.mxu0 0.0
        %2124 = vmatpush2.msra.mxu0 0.0
        %2125 = vmatprep.subr.mxu0 0.0
        %2126 = vmatpush2.msra.mxu0 0.0
        %2127 = vmatprep.subr.mxu0 0.0
        %2128 = vmatpush2.msra.mxu0 0.0
        %2129 = vmatprep.subr.mxu0 0.0
        %2130 = vmatpush2.msra.mxu0 0.0
        %2131 = vmatprep.subr.mxu0 0.0
        %2132 = vmatpush2.msra.mxu0 0.0
        %2133 = vmatprep.subr.mxu0 0.0
        %2134 = vmatpush2.msra.mxu0 0.0
        %2135 = vmatprep.subr.mxu0 0.0
        %2136 = vmatpush2.msra.mxu0 0.0
        %2137 = vmatprep.mubr.f32.mxu0 0.0
        %v2138 = vand.u32 %v1971, 4294901760
        %2139 = vmatmul.mubr.f32.gmra.mxu0 %v2138
        %v2140 = vpop.f32.mrf.mxu0
        %v2141 = vadd.f32 %v2050, %v2140
        %v2142 = vpop.f32.mrf.mxu0
        %2143 = vmatprep.mubr.f32.mxu0 0.0
        %v2144 = vand.u32 %v1974, 4294901760
        %2145 = vmatmul.mubr.f32.gmra.mxu0 %v2144
        %v2146 = vpop.f32.mrf.mxu0
        %v2147 = vadd.f32 %v2060, %v2146
        %v2148 = vpop.f32.mrf.mxu0
        %2149 = vdwg.mxu0
        %2150 = vmatprep.subr.mxu0 0.0
        %2151 = vmatpush1.msra.mxu0 0.0
        %2152 = vmatprep.subr.mxu0 0.0
        %2153 = vmatpush1.msra.mxu0 0.0
        %2154 = vmatprep.subr.mxu0 0.0
        %2155 = vmatpush1.msra.mxu0 0.0
        %2156 = vmatprep.subr.mxu0 0.0
        %2157 = vmatpush1.msra.mxu0 0.0
        %2158 = vmatprep.subr.mxu0 0.0
        %2159 = vmatpush1.msra.mxu0 0.0
        %2160 = vmatprep.subr.mxu0 0.0
        %2161 = vmatpush1.msra.mxu0 0.0
        %2162 = vmatprep.subr.mxu0 0.0
        %2163 = vmatpush1.msra.mxu0 0.0
        %2164 = vmatprep.subr.mxu0 0.0
        %2165 = vmatpush1.msra.mxu0 0.0
        %2166 = vmatprep.subr.mxu0 0.0
        %2167 = vmatpush1.msra.mxu0 0.0
        %2168 = vmatprep.subr.mxu0 0.0
        %2169 = vmatpush1.msra.mxu0 0.0
        %2170 = vmatprep.subr.mxu0 0.0
        %2171 = vmatpush1.msra.mxu0 0.0
        %2172 = vmatprep.subr.mxu0 0.0
        %2173 = vmatpush1.msra.mxu0 0.0
        %2174 = vmatprep.subr.mxu0 0.0
        %2175 = vmatpush1.msra.mxu0 0.0
        %2176 = vmatprep.subr.mxu0 0.0
        %2177 = vmatpush1.msra.mxu0 0.0
        %2178 = vmatprep.subr.mxu0 0.0
        %v2179 = vand.u32 %v418, 4294901760
        %v2180 = vsub.f32 %v418, %v2179
        %2181 = vmatpush1.msra.mxu0 %v2180
        %2182 = vmatprep.subr.mxu0 0.0
        %v2183 = vand.u32 %v417, 4294901760
        %v2184 = vsub.f32 %v417, %v2183
        %2185 = vmatpush1.msra.mxu0 %v2184
        %2186 = vmatprep.subr.mxu0 0.0
        %2187 = vmatpush2.msra.mxu0 0.0
        %2188 = vmatprep.subr.mxu0 0.0
        %2189 = vmatpush2.msra.mxu0 0.0
        %2190 = vmatprep.subr.mxu0 0.0
        %2191 = vmatpush2.msra.mxu0 0.0
        %2192 = vmatprep.subr.mxu0 0.0
        %2193 = vmatpush2.msra.mxu0 0.0
        %2194 = vmatprep.subr.mxu0 0.0
        %2195 = vmatpush2.msra.mxu0 0.0
        %2196 = vmatprep.subr.mxu0 0.0
        %2197 = vmatpush2.msra.mxu0 0.0
        %2198 = vmatprep.subr.mxu0 0.0
        %2199 = vmatpush2.msra.mxu0 0.0
        %2200 = vmatprep.subr.mxu0 0.0
        %2201 = vmatpush2.msra.mxu0 0.0
        %2202 = vmatprep.subr.mxu0 0.0
        %2203 = vmatpush2.msra.mxu0 0.0
        %2204 = vmatprep.subr.mxu0 0.0
        %2205 = vmatpush2.msra.mxu0 0.0
        %2206 = vmatprep.subr.mxu0 0.0
        %2207 = vmatpush2.msra.mxu0 0.0
        %2208 = vmatprep.subr.mxu0 0.0
        %2209 = vmatpush2.msra.mxu0 0.0
        %2210 = vmatprep.subr.mxu0 0.0
        %2211 = vmatpush2.msra.mxu0 0.0
        %2212 = vmatprep.subr.mxu0 0.0
        %2213 = vmatpush2.msra.mxu0 0.0
        %2214 = vmatprep.subr.mxu0 0.0
        %2215 = vmatpush2.msra.mxu0 0.0
        %2216 = vmatprep.subr.mxu0 0.0
        %2217 = vmatpush2.msra.mxu0 0.0
        %2218 = vmatprep.mubr.f32.mxu0 0.0
        %v2219 = vand.u32 %v1971, 4294901760
        %v2220 = vsub.f32 %v1971, %v2219
        %2221 = vmatmul.mubr.f32.gmra.mxu0 %v2220
        %v2222 = vpop.f32.mrf.mxu0
        %v2223 = vadd.f32 %v2141, %v2222
        %v2224 = vpop.f32.mrf.mxu0
        %2225 = vmatprep.mubr.f32.mxu0 0.0
        %v2226 = vand.u32 %v1974, 4294901760
        %v2227 = vsub.f32 %v1974, %v2226
        %2228 = vmatmul.mubr.f32.gmra.mxu0 %v2227
        %v2229 = vpop.f32.mrf.mxu0
        %v2230 = vadd.f32 %v2147, %v2229
        %v2231 = vpop.f32.mrf.mxu0
        %2232 = vdwg.mxu0
        %2233 = vmatprep.subr.mxu0 0.0
        %2234 = vmatpush1.msra.mxu0 0.0
        %2235 = vmatprep.subr.mxu0 0.0
        %2236 = vmatpush1.msra.mxu0 0.0
        %2237 = vmatprep.subr.mxu0 0.0
        %2238 = vmatpush1.msra.mxu0 0.0
        %2239 = vmatprep.subr.mxu0 0.0
        %2240 = vmatpush1.msra.mxu0 0.0
        %2241 = vmatprep.subr.mxu0 0.0
        %2242 = vmatpush1.msra.mxu0 0.0
        %2243 = vmatprep.subr.mxu0 0.0
        %2244 = vmatpush1.msra.mxu0 0.0
        %2245 = vmatprep.subr.mxu0 0.0
        %2246 = vmatpush1.msra.mxu0 0.0
        %2247 = vmatprep.subr.mxu0 0.0
        %2248 = vmatpush1.msra.mxu0 0.0
        %2249 = vmatprep.subr.mxu0 0.0
        %2250 = vmatpush1.msra.mxu0 0.0
        %2251 = vmatprep.subr.mxu0 0.0
        %2252 = vmatpush1.msra.mxu0 0.0
        %2253 = vmatprep.subr.mxu0 0.0
        %2254 = vmatpush1.msra.mxu0 0.0
        %2255 = vmatprep.subr.mxu0 0.0
        %2256 = vmatpush1.msra.mxu0 0.0
        %2257 = vmatprep.subr.mxu0 0.0
        %2258 = vmatpush1.msra.mxu0 0.0
        %2259 = vmatprep.subr.mxu0 0.0
        %2260 = vmatpush1.msra.mxu0 0.0
        %2261 = vmatprep.subr.mxu0 0.0
        %v2262 = vand.u32 %v418, 4294901760
        %2263 = vmatpush1.msra.mxu0 %v2262
        %2264 = vmatprep.subr.mxu0 0.0
        %v2265 = vand.u32 %v417, 4294901760
        %2266 = vmatpush1.msra.mxu0 %v2265
        %2267 = vmatprep.subr.mxu0 0.0
        %2268 = vmatpush2.msra.mxu0 0.0
        %2269 = vmatprep.subr.mxu0 0.0
        %2270 = vmatpush2.msra.mxu0 0.0
        %2271 = vmatprep.subr.mxu0 0.0
        %2272 = vmatpush2.msra.mxu0 0.0
        %2273 = vmatprep.subr.mxu0 0.0
        %2274 = vmatpush2.msra.mxu0 0.0
        %2275 = vmatprep.subr.mxu0 0.0
        %2276 = vmatpush2.msra.mxu0 0.0
        %2277 = vmatprep.subr.mxu0 0.0
        %2278 = vmatpush2.msra.mxu0 0.0
        %2279 = vmatprep.subr.mxu0 0.0
        %2280 = vmatpush2.msra.mxu0 0.0
        %2281 = vmatprep.subr.mxu0 0.0
        %2282 = vmatpush2.msra.mxu0 0.0
        %2283 = vmatprep.subr.mxu0 0.0
        %2284 = vmatpush2.msra.mxu0 0.0
        %2285 = vmatprep.subr.mxu0 0.0
        %2286 = vmatpush2.msra.mxu0 0.0
        %2287 = vmatprep.subr.mxu0 0.0
        %2288 = vmatpush2.msra.mxu0 0.0
        %2289 = vmatprep.subr.mxu0 0.0
        %2290 = vmatpush2.msra.mxu0 0.0
        %2291 = vmatprep.subr.mxu0 0.0
        %2292 = vmatpush2.msra.mxu0 0.0
        %2293 = vmatprep.subr.mxu0 0.0
        %2294 = vmatpush2.msra.mxu0 0.0
        %2295 = vmatprep.subr.mxu0 0.0
        %2296 = vmatpush2.msra.mxu0 0.0
        %2297 = vmatprep.subr.mxu0 0.0
        %2298 = vmatpush2.msra.mxu0 0.0
        %2299 = vmatprep.mubr.f32.mxu0 0.0
        %v2300 = vand.u32 %v1971, 4294901760
        %v2301 = vsub.f32 %v1971, %v2300
        %v2302 = vand.u32 %v2301, 4294901760
        %2303 = vmatmul.mubr.f32.gmra.mxu0 %v2302
        %v2304 = vpop.f32.mrf.mxu0
        %v2305 = vadd.f32 %v2223, %v2304
        %v2306 = vpop.f32.mrf.mxu0
        %2307 = vmatprep.mubr.f32.mxu0 0.0
        %v2308 = vand.u32 %v1974, 4294901760
        %v2309 = vsub.f32 %v1974, %v2308
        %v2310 = vand.u32 %v2309, 4294901760
        %2311 = vmatmul.mubr.f32.gmra.mxu0 %v2310
        %v2312 = vpop.f32.mrf.mxu0
        %v2313 = vadd.f32 %v2230, %v2312
        %v2314 = vpop.f32.mrf.mxu0
        %2315 = vdwg.mxu0
        %2316 = vmatprep.subr.mxu0 0.0
        %2317 = vmatpush1.msra.mxu0 0.0
        %2318 = vmatprep.subr.mxu0 0.0
        %2319 = vmatpush1.msra.mxu0 0.0
        %2320 = vmatprep.subr.mxu0 0.0
        %2321 = vmatpush1.msra.mxu0 0.0
        %2322 = vmatprep.subr.mxu0 0.0
        %2323 = vmatpush1.msra.mxu0 0.0
        %2324 = vmatprep.subr.mxu0 0.0
        %2325 = vmatpush1.msra.mxu0 0.0
        %2326 = vmatprep.subr.mxu0 0.0
        %2327 = vmatpush1.msra.mxu0 0.0
        %2328 = vmatprep.subr.mxu0 0.0
        %2329 = vmatpush1.msra.mxu0 0.0
        %2330 = vmatprep.subr.mxu0 0.0
        %2331 = vmatpush1.msra.mxu0 0.0
        %2332 = vmatprep.subr.mxu0 0.0
        %2333 = vmatpush1.msra.mxu0 0.0
        %2334 = vmatprep.subr.mxu0 0.0
        %2335 = vmatpush1.msra.mxu0 0.0
        %2336 = vmatprep.subr.mxu0 0.0
        %2337 = vmatpush1.msra.mxu0 0.0
        %2338 = vmatprep.subr.mxu0 0.0
        %2339 = vmatpush1.msra.mxu0 0.0
        %2340 = vmatprep.subr.mxu0 0.0
        %2341 = vmatpush1.msra.mxu0 0.0
        %2342 = vmatprep.subr.mxu0 0.0
        %2343 = vmatpush1.msra.mxu0 0.0
        %2344 = vmatprep.subr.mxu0 0.0
        %v2345 = vand.u32 %v418, 4294901760
        %v2346 = vsub.f32 %v418, %v2345
        %v2347 = vand.u32 %v2346, 4294901760
        %2348 = vmatpush1.msra.mxu0 %v2347
        %2349 = vmatprep.subr.mxu0 0.0
        %v2350 = vand.u32 %v417, 4294901760
        %v2351 = vsub.f32 %v417, %v2350
        %v2352 = vand.u32 %v2351, 4294901760
        %2353 = vmatpush1.msra.mxu0 %v2352
        %2354 = vmatprep.subr.mxu0 0.0
        %2355 = vmatpush2.msra.mxu0 0.0
        %2356 = vmatprep.subr.mxu0 0.0
        %2357 = vmatpush2.msra.mxu0 0.0
        %2358 = vmatprep.subr.mxu0 0.0
        %2359 = vmatpush2.msra.mxu0 0.0
        %2360 = vmatprep.subr.mxu0 0.0
        %2361 = vmatpush2.msra.mxu0 0.0
        %2362 = vmatprep.subr.mxu0 0.0
        %2363 = vmatpush2.msra.mxu0 0.0
        %2364 = vmatprep.subr.mxu0 0.0
        %2365 = vmatpush2.msra.mxu0 0.0
        %2366 = vmatprep.subr.mxu0 0.0
        %2367 = vmatpush2.msra.mxu0 0.0
        %2368 = vmatprep.subr.mxu0 0.0
        %2369 = vmatpush2.msra.mxu0 0.0
        %2370 = vmatprep.subr.mxu0 0.0
        %2371 = vmatpush2.msra.mxu0 0.0
        %2372 = vmatprep.subr.mxu0 0.0
        %2373 = vmatpush2.msra.mxu0 0.0
        %2374 = vmatprep.subr.mxu0 0.0
        %2375 = vmatpush2.msra.mxu0 0.0
        %2376 = vmatprep.subr.mxu0 0.0
        %2377 = vmatpush2.msra.mxu0 0.0
        %2378 = vmatprep.subr.mxu0 0.0
        %2379 = vmatpush2.msra.mxu0 0.0
        %2380 = vmatprep.subr.mxu0 0.0
        %2381 = vmatpush2.msra.mxu0 0.0
        %2382 = vmatprep.subr.mxu0 0.0
        %2383 = vmatpush2.msra.mxu0 0.0
        %2384 = vmatprep.subr.mxu0 0.0
        %2385 = vmatpush2.msra.mxu0 0.0
        %2386 = vmatprep.mubr.f32.mxu0 0.0
        %v2387 = vand.u32 %v1971, 4294901760
        %2388 = vmatmul.mubr.f32.gmra.mxu0 %v2387
        %v2389 = vpop.f32.mrf.mxu0
        %v2390 = vadd.f32 %v2305, %v2389
        %v2391 = vpop.f32.mrf.mxu0
        %2392 = vmatprep.mubr.f32.mxu0 0.0
        %v2393 = vand.u32 %v1974, 4294901760
        %2394 = vmatmul.mubr.f32.gmra.mxu0 %v2393
        %v2395 = vpop.f32.mrf.mxu0
        %v2396 = vadd.f32 %v2313, %v2395
        %v2397 = vpop.f32.mrf.mxu0
        %2398 = vdwg.mxu0
        %2399 = vmatprep.subr.mxu0 0.0
        %2400 = vmatpush1.msra.mxu0 0.0
        %2401 = vmatprep.subr.mxu0 0.0
        %2402 = vmatpush1.msra.mxu0 0.0
        %2403 = vmatprep.subr.mxu0 0.0
        %2404 = vmatpush1.msra.mxu0 0.0
        %2405 = vmatprep.subr.mxu0 0.0
        %2406 = vmatpush1.msra.mxu0 0.0
        %2407 = vmatprep.subr.mxu0 0.0
        %2408 = vmatpush1.msra.mxu0 0.0
        %2409 = vmatprep.subr.mxu0 0.0
        %2410 = vmatpush1.msra.mxu0 0.0
        %2411 = vmatprep.subr.mxu0 0.0
        %2412 = vmatpush1.msra.mxu0 0.0
        %2413 = vmatprep.subr.mxu0 0.0
        %2414 = vmatpush1.msra.mxu0 0.0
        %2415 = vmatprep.subr.mxu0 0.0
        %2416 = vmatpush1.msra.mxu0 0.0
        %2417 = vmatprep.subr.mxu0 0.0
        %2418 = vmatpush1.msra.mxu0 0.0
        %2419 = vmatprep.subr.mxu0 0.0
        %2420 = vmatpush1.msra.mxu0 0.0
        %2421 = vmatprep.subr.mxu0 0.0
        %2422 = vmatpush1.msra.mxu0 0.0
        %2423 = vmatprep.subr.mxu0 0.0
        %2424 = vmatpush1.msra.mxu0 0.0
        %2425 = vmatprep.subr.mxu0 0.0
        %2426 = vmatpush1.msra.mxu0 0.0
        %2427 = vmatprep.subr.mxu0 0.0
        %v2428 = vand.u32 %v418, 4294901760
        %2429 = vmatpush1.msra.mxu0 %v2428
        %2430 = vmatprep.subr.mxu0 0.0
        %v2431 = vand.u32 %v417, 4294901760
        %2432 = vmatpush1.msra.mxu0 %v2431
        %2433 = vmatprep.subr.mxu0 0.0
        %2434 = vmatpush2.msra.mxu0 0.0
        %2435 = vmatprep.subr.mxu0 0.0
        %2436 = vmatpush2.msra.mxu0 0.0
        %2437 = vmatprep.subr.mxu0 0.0
        %2438 = vmatpush2.msra.mxu0 0.0
        %2439 = vmatprep.subr.mxu0 0.0
        %2440 = vmatpush2.msra.mxu0 0.0
        %2441 = vmatprep.subr.mxu0 0.0
        %2442 = vmatpush2.msra.mxu0 0.0
        %2443 = vmatprep.subr.mxu0 0.0
        %2444 = vmatpush2.msra.mxu0 0.0
        %2445 = vmatprep.subr.mxu0 0.0
        %2446 = vmatpush2.msra.mxu0 0.0
        %2447 = vmatprep.subr.mxu0 0.0
        %2448 = vmatpush2.msra.mxu0 0.0
        %2449 = vmatprep.subr.mxu0 0.0
        %2450 = vmatpush2.msra.mxu0 0.0
        %2451 = vmatprep.subr.mxu0 0.0
        %2452 = vmatpush2.msra.mxu0 0.0
        %2453 = vmatprep.subr.mxu0 0.0
        %2454 = vmatpush2.msra.mxu0 0.0
        %2455 = vmatprep.subr.mxu0 0.0
        %2456 = vmatpush2.msra.mxu0 0.0
        %2457 = vmatprep.subr.mxu0 0.0
        %2458 = vmatpush2.msra.mxu0 0.0
        %2459 = vmatprep.subr.mxu0 0.0
        %2460 = vmatpush2.msra.mxu0 0.0
        %2461 = vmatprep.subr.mxu0 0.0
        %2462 = vmatpush2.msra.mxu0 0.0
        %2463 = vmatprep.subr.mxu0 0.0
        %2464 = vmatpush2.msra.mxu0 0.0
        %2465 = vmatprep.mubr.f32.mxu0 0.0
        %v2466 = vand.u32 %v1971, 4294901760
        %2467 = vmatmul.mubr.f32.gmra.mxu0 %v2466
        %v2468 = vpop.f32.mrf.mxu0
        %v2469 = vadd.f32 %v2390, %v2468
        %v2470 = vpop.f32.mrf.mxu0
        %2471 = vmatprep.mubr.f32.mxu0 0.0
        %v2472 = vand.u32 %v1974, 4294901760
        %2473 = vmatmul.mubr.f32.gmra.mxu0 %v2472
        %v2474 = vpop.f32.mrf.mxu0
        %v2475 = vadd.f32 %v2396, %v2474
        %v2476 = vpop.f32.mrf.mxu0
        %2477 = vdwg.mxu0
        %v2478 = vmax.f32 %v2469, 0.0
        %v2479 = vmax.f32 %v2475, 0.0
        %v2480 = vmin.f32 %v2478, 255.0
        %v2481 = vmin.f32 %v2479, 255.0
        %v2482 = vmul.f32 %v2480, 0.003921569
        %v2483 = vmul.f32 %v2481, 0.003921569
        %2484 = vst.msk [vmem:[%s391] sm:$0xff] %vm429, %v2482
        %2485 = vst.msk [vmem:[%s391 + $0x8] sm:$0xff] %vm429, %v2483
        %s2486 = smul.u32 2, %s34
        %p2487 = scmp.lt.s32.totalorder %s32, 2
        %s2488 = scalar_select %p2487, %s32, 2
        %p2489 = scmp.lt.s32.totalorder %s33, 1
        %s2490 = scalar_select %p2489, %s33, 1
        %p2491 = scmp.lt.s32.totalorder %s2486, 1
        %s2492 = scalar_select %p2491, %s2486, 1
        %p2493 = scmp.lt.s32.totalorder %s35, 0
        %s2494 = scalar_select %p2493, %s35, 0
        %s2495 = sadd.s32 %s2494, %s2492
        %s2496 = smul.addr %s2490, 2
        %s2497 = sadd.s32 %s2495, %s2496
        %s2498 = smul.addr %s2488, 4
        %s2499 = sadd.s32 %s2497, %s2498
        %s2500 = smul.addr %s2499, 8
        %s2501 = scalar_lea.vmem %s7, %s2500
        %s2502 = sand.u32 %s256, 1
        %s2503 = scalar_lea.sflag [#allocation4], %s2502
        %s2504 = sand.u32 %s256, 1
        %s2505 = smul.addr %s2504, 16
        %s2506 = scalar_lea.vmem [#allocation5], %s2505
        // Predicated region
        $region53: #{diff_jpeg_forward.1} parent=47 // pred_check
          %p2507 = pneg %p234
        $region54: #{diff_jpeg_forward.1} parent=47 // pred_check_branch
          %2509 = sbr.rel (%p2507) target = $region56
        $region55: #{diff_jpeg_forward.1} parent=47 // pred_region
          %s2510 = smul.u32 2, %s34
        $region56: #{diff_jpeg_forward.1} parent=47 // pred_fallthru
          _
        // Predicated region
        $region57: #{diff_jpeg_forward.1} parent=47 // pred_check
          %p2511 = pneg %p266
        $region58: #{diff_jpeg_forward.1} parent=47 // pred_check_branch
          %2513 = sbr.rel (%p2511) target = $region60
        $region59: #{diff_jpeg_forward.1} parent=47 // pred_region
          %s2514 = smul.u32 2, %s34
          %s2516 = ssub.s32 256, 256
          %2517 = vsyncadd %s2503, %s2516
          %s2518 = sadd.s32 %s35, %s2514
          %s2519 = smul.addr %s32, 2
          %s2520 = sadd.s32 %s2518, %s2519
          %s2521 = smul.addr %s33, 6
          %s2522 = sadd.s32 %s2520, %s2521
          %s2523 = smul.addr %s2522, 128
          %s2524 = scalar_lea.hbm %s8, %s2523
          %s2525 = sshll.u32 %s2506, 4
          %s2526 = int_to_ptr.vmem [resolvable:$true] %s2525
          %2531 = dma.vmem_to_hbm [thread:$0]  %s2526, 256, %s2524, %s2503, 128, 128, 8
        $region60: #{diff_jpeg_forward.1} parent=47 // pred_fallthru
          _
      $region48: #{diff_jpeg_forward.1} parent=5 // pred_fallthru
        _
      %p2532 = scmp.le.s32.totalorder 2, %s21
      // Predicated region
      $region61: #{diff_jpeg_forward.1} parent=5 // pred_check
        %p2533 = pneg %p2532
      $region62: #{diff_jpeg_forward.1} parent=5 // pred_check_branch
        %2535 = sbr.rel (%p2533) target = $region64
      $region63: #{diff_jpeg_forward.1} parent=5 // pred_region
        %s2536 = ssub.s32 %s21, 2
        // Predicated region
        $region65: #{diff_jpeg_forward.1} parent=63 // pred_check
          %p2537 = pneg %p240
        $region66: #{diff_jpeg_forward.1} parent=63 // pred_check_branch
          %2539 = sbr.rel (%p2537) target = $region68
        $region67: #{diff_jpeg_forward.1} parent=63 // pred_region
          %s2540 = smul.u32 2, %s38
          %p2541 = scmp.lt.s32.totalorder %s36, 2
          %s2542 = scalar_select %p2541, %s36, 2
          %p2543 = scmp.lt.s32.totalorder %s37, 1
          %s2544 = scalar_select %p2543, %s37, 1
          %p2545 = scmp.lt.s32.totalorder %s2540, 1
          %s2546 = scalar_select %p2545, %s2540, 1
          %p2547 = scmp.lt.s32.totalorder %s39, 0
          %s2548 = scalar_select %p2547, %s39, 0
          %s2549 = sadd.s32 %s2548, %s2546
          %s2550 = smul.addr %s2544, 2
          %s2551 = sadd.s32 %s2549, %s2550
          %s2552 = smul.addr %s2542, 4
          %s2553 = sadd.s32 %s2551, %s2552
          %s2554 = smul.addr %s2553, 8
          %s2555 = scalar_lea.vmem %s7, %s2554
        $region68: #{diff_jpeg_forward.1} parent=63 // pred_fallthru
          _
        // Predicated region
        $region69: #{diff_jpeg_forward.1} parent=63 // pred_check
          %p2556 = pneg %p272
        $region70: #{diff_jpeg_forward.1} parent=63 // pred_check_branch
          %2558 = sbr.rel (%p2556) target = $region72
        $region71: #{diff_jpeg_forward.1} parent=63 // pred_region
          %s2559 = sand.u32 %s257, 1
          %s2560 = scalar_lea.sflag [#allocation4], %s2559
          %s2561 = sand.u32 %s257, 1
          %s2562 = smul.addr %s2561, 16
          %s2563 = scalar_lea.vmem [#allocation5], %s2562
          %2564 = dma.done %s2560, 256
        $region72: #{diff_jpeg_forward.1} parent=63 // pred_fallthru
          _
      $region64: #{diff_jpeg_forward.1} parent=5 // pred_fallthru
        _
    $region6: #{diff_jpeg_forward.1} parent=1 // loop_footer
      %s25 = sadd.s32 1, %s21
    $region7: #{diff_jpeg_forward.1} parent=1 // loop_footer_branch
      %20 = sbr.rel target = $region3
    $region8: #{diff_jpeg_forward.1} parent=1 // loop_exit
      _
    %2565 = vsyncpa [#allocation3], 1
    %s2566 = scalar_lea.sflag [#allocation3], 1
    %2567 = vsyncpa %s2566, 1
    %2568 = vsyncpa [#allocation4], 1
    %s2569 = scalar_lea.sflag [#allocation4], 1
    %2570 = vsyncpa %s2569, 1

</llo_original>
